<compile_context>
chip_gen: v7x
topology: tpu7x:2x2x1
jax: 0.10.0
libtpu: 0.0.40
codegen_flags: <defaults>
</compile_context>

<pallas_src>
import functools

import jax
import jax.numpy as jnp
from jax.experimental import pallas as pl
from jax.experimental.pallas import tpu as pltpu

NEG_SLOPE = 0.01  # nn.LeakyReLU() default
VMEM_LIMIT = 64 * 1024 * 1024


def _cdiv(a, b):
    return -(-a // b)


def _choose_tile(out_len, halo, l_tile_max=512):
    """Pick a lane-dense L tile (multiple of 128) and halo block width."""
    h_blk = 128 * _cdiv(max(halo, 1), 128)
    lt = min(l_tile_max, 128 * _cdiv(out_len, 128))
    lt = max(lt, h_blk)
    lt = h_blk * _cdiv(lt, h_blk)          # halo block width must divide tile
    return lt, h_blk


def _lrelu(v):
    return jnp.where(v > 0, v, NEG_SLOPE * v)


# ----------------------------------------------------------------------------
# In-kernel helper: K-tap dilated conv as ONE MXU matmul (contraction K*C_in)
# ----------------------------------------------------------------------------
def _matmul_taps(a_bf16, w_ref, b_ref, taps, dilation, offset, out_len):
    # a_bf16: (C_in, >= offset + (taps-1)*dilation + out_len) bf16
    # w_ref : (C_out, taps*C_in) bf16   (columns ordered tap-major, C_in-minor)
    # b_ref : (C_out, 1) f32
    parts = [a_bf16[:, offset + t * dilation: offset + t * dilation + out_len]
             for t in range(taps)]
    stacked = jnp.concatenate(parts, axis=0) if taps > 1 else parts[0]
    acc = jnp.dot(w_ref[...], stacked, preferred_element_type=jnp.float32)
    return acc + b_ref[...]                # fp32 bias folded into epilogue


# ----------------------------------------------------------------------------
# Kernel 1: fused LeakyReLU + conv (used for the polyphase ConvTranspose)
# ----------------------------------------------------------------------------
def _conv1d_kernel(xm_ref, xh_ref, w_ref, b_ref, o_ref, *, taps, dilation):
    # xm_ref: (1, C_in, LT) bf16 main tile; xh_ref: (1, C_in, H) bf16 halo tile
    x = jnp.concatenate([xm_ref[0], xh_ref[0]], axis=1)          # (C_in, LT+H)
    a = _lrelu(x.astype(jnp.float32)).astype(jnp.bfloat16)       # LReLU in f32
    l_out = o_ref.shape[2]
    y = _matmul_taps(a, w_ref, b_ref, taps, dilation, 0, l_out)
    o_ref[0] = y.astype(o_ref.dtype)


def conv1d_tiled(x, w, b, *, dilation, pad_left, out_len,
                 out_dtype=jnp.bfloat16, l_tile=512):
    """out[n,co,m] = b[co] + sum_{ci,t} w[co,ci,t]*leaky(x)[n,ci,m+t*dil-pad_left]
       for m in [0,out_len); x treated as zero outside [0,L)."""
    N, C_in, L = x.shape
    C_out, _, K = w.shape
    halo = dilation * (K - 1)
    lt, H = _choose_tile(out_len, halo, l_tile)
    nt = _cdiv(out_len, lt)
    T = nt * lt
    Lp = (nt + 1) * lt                      # padded length: multiple of lt & H

    xq = x.astype(jnp.bfloat16)
    x_p = jnp.pad(xq, ((0, 0), (0, 0), (pad_left, Lp - pad_left - L)))
    wk = jnp.transpose(w, (0, 2, 1)).reshape(C_out, K * C_in).astype(jnp.bfloat16)
    b2 = b.reshape(C_out, 1).astype(jnp.float32)

    kernel = functools.partial(_conv1d_kernel, taps=K, dilation=dilation)
    flops = 2 * N * T * C_out * C_in * K
    bytes_accessed = x_p.size * 2 + wk.size * 2 + N * C_out * T * 4

    out = pl.pallas_call(
        kernel,
        out_shape=jax.ShapeDtypeStruct((N, C_out, T), out_dtype),
        grid=(N, nt),
        in_specs=[
            pl.BlockSpec((1, C_in, lt), lambda n, j: (n, 0, j)),
            pl.BlockSpec((1, C_in, H), lambda n, j: (n, 0, (j + 1) * (lt // H))),
            pl.BlockSpec((C_out, K * C_in), lambda n, j: (0, 0)),
            pl.BlockSpec((C_out, 1), lambda n, j: (0, 0)),
        ],
        out_specs=pl.BlockSpec((1, C_out, lt), lambda n, j: (n, 0, j)),
        compiler_params=pltpu.CompilerParams(
            dimension_semantics=("parallel", "parallel"),
            vmem_limit_bytes=VMEM_LIMIT),
        cost_estimate=pl.CostEstimate(flops=flops, transcendentals=0,
                                      bytes_accessed=bytes_accessed),
    )(x_p, x_p, wk, b2)
    return out[:, :, :out_len]


# ----------------------------------------------------------------------------
# Kernel 2: fully fused MRF — every (LReLU->conv(k,d)->LReLU->conv(k,1)) branch
#           in one pallas_call; branch sum accumulated in VMEM registers.
# ----------------------------------------------------------------------------
def _mrf_kernel(*refs, branch_cfgs, lt, l_up):
    hm_ref, hh_ref = refs[0], refs[1]
    o_ref = refs[-1]
    j = pl.program_id(1)

    x = jnp.concatenate([hm_ref[0], hh_ref[0]], axis=1)          # (C, LT+H) bf16
    a0 = _lrelu(x.astype(jnp.float32)).astype(jnp.bfloat16)      # shared by all branches

    acc = jnp.zeros(o_ref.shape[1:], jnp.float32)                # (C, LT)
    for bi, (k, d, shift) in enumerate(branch_cfgs):
        w1_ref, b1_ref, w2_ref, b2_ref = refs[2 + 4 * bi: 6 + 4 * bi]
        p2 = (k - 1) // 2
        l1 = lt + (k - 1)                    # conv1 must cover conv2's window
        h1 = _matmul_taps(a0, w1_ref, b1_ref, k, d, shift, l1)   # (C, l1) f32
        a1 = _lrelu(h1)
        # 'same' padding of conv2: its input must be ZERO outside [0, l_up).
        pos = j * lt - p2 + jax.lax.broadcasted_iota(jnp.int32, (1, l1), 1)
        a1 = jnp.where((pos >= 0) & (pos < l_up), a1, 0.0).astype(jnp.bfloat16)
        acc = acc + _matmul_taps(a1, w2_ref, b2_ref, k, 1, 0, lt)
    o_ref[0] = acc


# ----------------------------------------------------------------------------
# GeneratorBlock forward
# ----------------------------------------------------------------------------
def generator_block_apply(params, x, *, upsample_size, upsample_stride,
                          resblock_size, resblock_dilations, l_tile=512):
    N, C, L = x.shape
    Ku, Su = upsample_size, upsample_stride
    Ch = C // 2
    p = (Ku - Su) // 2

    # ---- Stage 1: LeakyReLU + ConvTranspose1d via polyphase conv -----------
    Kp = _cdiv(Ku, Su)
    L_up = (L - 1) * Su + Ku - 2 * p                    # transposed-conv length
    Lq = _cdiv(L_up + p, Su)                            # per-phase length
    W = params["up_w"]                                  # (C, Ch, Ku) torch layout
    W_pad = jnp.pad(W, ((0, 0), (0, 0), (0, Kp * Su - Ku)))
    W_r = W_pad.reshape(C, Ch, Kp, Su)                  # tap = s*Su + r
    # W2[r*Ch+co, ci, s'] = W[ci, co, (Kp-1-s')*Su + r]
    W2 = jnp.transpose(W_r[:, :, ::-1, :], (3, 1, 0, 2)).reshape(Su * Ch, C, Kp)
    b_up = jnp.tile(params["up_b"], Su)                 # bias per (r, co)

    phases = conv1d_tiled(x, W2, b_up, dilation=1, pad_left=Kp - 1,
                          out_len=Lq, out_dtype=jnp.bfloat16, l_tile=l_tile)
    inter = phases.reshape(N, Su, Ch, Lq).transpose(0, 2, 3, 1).reshape(
        N, Ch, Lq * Su)
    h = inter[:, :, p:p + L_up]                         # (N, Ch, L_up) bf16

    # ---- Stage 2: fused MRF (all branches in ONE pallas_call) --------------
    cfgs = []
    for k, dils in zip(resblock_size, resblock_dilations):
        for d in dils:
            bl = (d * (k - 1)) // 2 + (k - 1) // 2      # conv1 + conv2 left pads
            hl = (k - 1) * (d + 1)                      # total window reach
            cfgs.append((k, d, bl, hl))
    PL = max(c[2] for c in cfgs)                        # shared left pad of h
    halo_max = max(PL - c[2] + c[3] for c in cfgs)
    lt, H = _choose_tile(L_up, halo_max, l_tile)
    nt = _cdiv(L_up, lt)
    T = nt * lt
    Lp = (nt + 1) * lt

    h_pad = jnp.pad(h, ((0, 0), (0, 0), (PL, Lp - PL - L_up)))   # bf16, padded once
    branch_cfgs = tuple((k, d, PL - bl) for (k, d, bl, _) in cfgs)

    args = [h_pad, h_pad]
    in_specs = [
        pl.BlockSpec((1, Ch, lt), lambda n, j: (n, 0, j)),
        pl.BlockSpec((1, Ch, H), lambda n, j: (n, 0, (j + 1) * (lt // H))),
    ]
    flops = 0
    for i, (k, dils) in enumerate(zip(resblock_size, resblock_dilations)):
        for jd, d in enumerate(dils):
            pw = params["mrf"][i][jd]
            w1 = jnp.transpose(pw["w1"], (0, 2, 1)).reshape(Ch, k * Ch).astype(jnp.bfloat16)
            w2 = jnp.transpose(pw["w2"], (0, 2, 1)).reshape(Ch, k * Ch).astype(jnp.bfloat16)
            b1 = pw["b1"].reshape(Ch, 1).astype(jnp.float32)
            b2 = pw["b2"].reshape(Ch, 1).astype(jnp.float32)
            args += [w1, b1, w2, b2]
            in_specs += [
                pl.BlockSpec((Ch, k * Ch), lambda n, j: (0, 0)),
                pl.BlockSpec((Ch, 1), lambda n, j: (0, 0)),
                pl.BlockSpec((Ch, k * Ch), lambda n, j: (0, 0)),
                pl.BlockSpec((Ch, 1), lambda n, j: (0, 0)),
            ]
            flops += 2 * 2 * N * T * Ch * Ch * k

    bytes_accessed = (h_pad.size * 2
                      + sum(int(a.size) * a.dtype.itemsize for a in args[2:])
                      + N * Ch * T * 4)
    kernel = functools.partial(_mrf_kernel, branch_cfgs=branch_cfgs,
                               lt=lt, l_up=L_up)
    out = pl.pallas_call(
        kernel,
        out_shape=jax.ShapeDtypeStruct((N, Ch, T), jnp.float32),
        grid=(N, nt),
        in_specs=in_specs,
        out_specs=pl.BlockSpec((1, Ch, lt), lambda n, j: (n, 0, j)),
        compiler_params=pltpu.CompilerParams(
            dimension_semantics=("parallel", "parallel"),
            vmem_limit_bytes=VMEM_LIMIT),
        cost_estimate=pl.CostEstimate(flops=flops, transcendentals=0,
                                      bytes_accessed=bytes_accessed),
    )(*args)
    return out[:, :, :L_up]


# ----------------------------------------------------------------------------
# Pure-JAX reference (lax conv, bf16 rounding mirrored) for validation
# ----------------------------------------------------------------------------
def _q(v):
    return v.astype(jnp.bfloat16).astype(jnp.float32)


def _ref_conv(x, w, b, *, padding, lhs_dilation=1, rhs_dilation=1):
    y = jax.lax.conv_general_dilated(
        x, w, window_strides=(1,), padding=(padding,),
        lhs_dilation=(lhs_dilation,), rhs_dilation=(rhs_dilation,),
        dimension_numbers=("NCH", "OIH", "NCH"),
        precision=jax.lax.Precision.HIGHEST)
    return y + b[None, :, None]


def reference_forward(params, x, Ku, Su, resblock_size, resblock_dilations):
    p = (Ku - Su) // 2
    a = _q(_lrelu(_q(x)))
    w_conv = jnp.transpose(_q(params["up_w"])[:, :, ::-1], (1, 0, 2))
    h = _ref_conv(a, w_conv, params["up_b"],
                  padding=(Ku - 1 - p, Ku - 1 - p), lhs_dilation=Su)
    out = jnp.zeros_like(h)
    for i, (k, dils) in enumerate(zip(resblock_size, resblock_dilations)):
        for j, d in enumerate(dils):
            pw = params["mrf"][i][j]
            tot = d * (k - 1)
            a0 = _q(_lrelu(_q(h)))
            h1 = _ref_conv(a0, _q(pw["w1"]), pw["b1"],
                           padding=(tot // 2, tot - tot // 2), rhs_dilation=d)
            a1 = _q(_lrelu(h1))
            h2 = _ref_conv(a1, _q(pw["w2"]), pw["b2"],
                           padding=((k - 1) // 2, (k - 1) - (k - 1) // 2))
            out = out + h2
    return out


# ----------------------------------------------------------------------------
# Deterministic parameter init (weight_norm is identity at init)
# ----------------------------------------------------------------------------
def init_params(key, channels, Ku, resblock_size, resblock_dilations):
    C, Ch = channels, channels // 2
    keys = iter(jax.random.split(key, 256))
    params = {
        "up_w": 0.1 * jax.random.normal(next(keys), (C, Ch, Ku), jnp.float32),
        "up_b": 0.1 * jax.random.normal(next(keys), (Ch,), jnp.float32),
        "mrf": [],
    }
    for k, dils in zip(resblock_size, resblock_dilations):
        blocks = []
        for _ in dils:
            blocks.append(dict(
                w1=0.1 * jax.random.normal(next(keys), (Ch, Ch, k), jnp.float32),
                b1=0.1 * jax.random.normal(next(keys), (Ch,), jnp.float32),
                w2=0.1 * jax.random.normal(next(keys), (Ch, Ch, k), jnp.float32),
                b2=0.1 * jax.random.normal(next(keys), (Ch,), jnp.float32),
            ))
        params["mrf"].append(blocks)
    return params


if __name__ == "__main__":
    key = jax.random.PRNGKey(0)
    channels, Ku, Su = 8, 4, 2
    resblock_size = [3, 5]
    resblock_dilations = [[1, 3], [1]]
    N, L = 2, 16

    kp, kx = jax.random.split(key)
    params = init_params(kp, channels, Ku, resblock_size, resblock_dilations)
    x = jax.random.normal(kx, (N, channels, L), jnp.float32)

    fwd = jax.jit(functools.partial(
        generator_block_apply, upsample_size=Ku, upsample_stride=Su,
        resblock_size=tuple(resblock_size),
        resblock_dilations=tuple(tuple(d) for d in resblock_dilations)))
    out = jax.block_until_ready(fwd(params, x))

    ref = jax.block_until_ready(
        reference_forward(params, x, Ku, Su, resblock_size, resblock_dilations))

    assert out.shape == (N, channels // 2, L * Su), out.shape
    err = float(jnp.max(jnp.abs(out - ref)))
    assert err < 1e-2, err
    print("KERNEL_OK")
</pallas_src>

<mosaic_0001>
module attributes {stable_mosaic.version = 11 : i64} {
  func.func @_conv1d_kernel(%arg0: i32, %arg1: i32, %arg2: memref<1x8x128xbf16, #tpu.memory_space<vmem>>, %arg3: memref<1x8x128xbf16, #tpu.memory_space<vmem>>, %arg4: memref<8x16xbf16, #tpu.memory_space<vmem>>, %arg5: memref<8x1xf32, #tpu.memory_space<vmem>>, %arg6: memref<1x8x128xbf16, #tpu.memory_space<vmem>>) attributes {dimension_semantics = [#tpu.dimension_semantics<parallel>, #tpu.dimension_semantics<parallel>], iteration_bounds = array<i64: 2, 1>, scalar_prefetch = 0 : i64, scratch_operands = 0 : i64, tpu.core_type = #tpu.core_type<tc>, window_params = [{transform_indices = @transform_0, window_bounds = array<i64: 1, 8, 128>}, {transform_indices = @transform_1, window_bounds = array<i64: 1, 8, 128>}, {pipeline_mode = #tpu.pipeline_mode<synchronous>, transform_indices = @transform_2, window_bounds = array<i64: 8, 16>}, {pipeline_mode = #tpu.pipeline_mode<synchronous>, transform_indices = @transform_3, window_bounds = array<i64: 8, 1>}, {transform_indices = @transform_4, window_bounds = array<i64: 1, 8, 128>}]} {
    %c0 = arith.constant 0 : index
    %c0_0 = arith.constant 0 : index
    %c0_1 = arith.constant 0 : index
    %0 = vector.load %arg2[%c0, %c0_0, %c0_1] : memref<1x8x128xbf16, #tpu.memory_space<vmem>>, vector<1x8x128xbf16>
    %1 = vector.shape_cast %0 : vector<1x8x128xbf16> to vector<8x128xbf16>
    %c0_2 = arith.constant 0 : index
    %c0_3 = arith.constant 0 : index
    %c0_4 = arith.constant 0 : index
    %2 = vector.load %arg3[%c0_2, %c0_3, %c0_4] : memref<1x8x128xbf16, #tpu.memory_space<vmem>>, vector<1x8x128xbf16>
    %3 = vector.shape_cast %2 : vector<1x8x128xbf16> to vector<8x128xbf16>
    %4 = tpu.concatenate %1, %3 in 1 : vector<8x128xbf16>, vector<8x128xbf16> -> vector<8x256xbf16>
    %5 = arith.extf %4 : vector<8x256xbf16> to vector<8x256xf32>
    %cst = arith.constant 0.000000e+00 : f32
    %6 = vector.broadcast %cst : f32 to vector<8x256xf32>
    %7 = arith.cmpf ogt, %5, %6 : vector<8x256xf32>
    %cst_5 = arith.constant 0.00999999977 : f32
    %8 = vector.broadcast %cst_5 : f32 to vector<8x256xf32>
    %9 = arith.mulf %8, %5 : vector<8x256xf32>
    %10 = arith.select %7, %5, %9 : vector<8x256xi1>, vector<8x256xf32>
    %11 = arith.truncf %10 : vector<8x256xf32> to vector<8x256xbf16>
    %12 = vector.extract_strided_slice %11 {offsets = [0, 0], sizes = [8, 128], strides = [1, 1]} : vector<8x256xbf16> to vector<8x128xbf16>
    %13 = vector.extract_strided_slice %11 {offsets = [0, 1], sizes = [8, 128], strides = [1, 1]} : vector<8x256xbf16> to vector<8x128xbf16>
    %14 = tpu.concatenate %12, %13 in 0 : vector<8x128xbf16>, vector<8x128xbf16> -> vector<16x128xbf16>
    %c0_6 = arith.constant 0 : index
    %c0_7 = arith.constant 0 : index
    %15 = vector.load %arg4[%c0_6, %c0_7] : memref<8x16xbf16, #tpu.memory_space<vmem>>, vector<8x16xbf16>
    %cst_8 = arith.constant dense<0.000000e+00> : vector<8x128xf32>
    %16 = tpu.matmul %15, %14, %cst_8 {dimension_numbers = #tpu.dot_dimension_numbers<[1], [0], [0], [1], [0, 0, 1, 1], [], []>} : vector<8x16xbf16>, vector<16x128xbf16>, vector<8x128xf32> -> vector<8x128xf32>
    %c0_9 = arith.constant 0 : index
    %c0_10 = arith.constant 0 : index
    %17 = vector.load %arg5[%c0_9, %c0_10] : memref<8x1xf32, #tpu.memory_space<vmem>>, vector<8x1xf32>
    %18 = vector.broadcast %17 : vector<8x1xf32> to vector<8x128xf32>
    %19 = arith.addf %16, %18 : vector<8x128xf32>
    %20 = arith.truncf %19 : vector<8x128xf32> to vector<8x128xbf16>
    %c0_11 = arith.constant 0 : index
    %c0_12 = arith.constant 0 : index
    %c0_13 = arith.constant 0 : index
    %21 = vector.load %arg6[%c0_11, %c0_12, %c0_13] : memref<1x8x128xbf16, #tpu.memory_space<vmem>>, vector<1x8x128xbf16>
    %22 = vector.shape_cast %21 : vector<1x8x128xbf16> to vector<8x128xbf16>
    %23 = vector.shape_cast %20 : vector<8x128xbf16> to vector<1x8x128xbf16>
    tpu.vector_store %arg6[%c0_11, %c0_12, %c0_13], %23 {strides = array<i32>} : memref<1x8x128xbf16, #tpu.memory_space<vmem>>, vector<1x8x128xbf16>,
    return
  }
  func.func @transform_0(%arg0: i32, %arg1: i32) -> (i32, i32, i32) {
    %c0_i32 = arith.constant 0 : i32
    %c0_i32_0 = arith.constant 0 : i32
    return %arg0, %c0_i32, %arg1 : i32, i32, i32
  }
  func.func @transform_1(%arg0: i32, %arg1: i32) -> (i32, i32, i32) {
    %c1_i32 = arith.constant 1 : i32
    %0 = arith.addi %arg1, %c1_i32 : i32
    %c1_i32_0 = arith.constant 1 : i32
    %1 = arith.muli %0, %c1_i32_0 : i32
    %c0_i32 = arith.constant 0 : i32
    %c0_i32_1 = arith.constant 0 : i32
    return %arg0, %c0_i32, %1 : i32, i32, i32
  }
  func.func @transform_2(%arg0: i32, %arg1: i32) -> (i32, i32) {
    %c0_i32 = arith.constant 0 : i32
    %c0_i32_0 = arith.constant 0 : i32
    %c0_i32_1 = arith.constant 0 : i32
    return %c0_i32, %c0_i32_0 : i32, i32
  }
  func.func @transform_3(%arg0: i32, %arg1: i32) -> (i32, i32) {
    %c0_i32 = arith.constant 0 : i32
    %c0_i32_0 = arith.constant 0 : i32
    %c0_i32_1 = arith.constant 0 : i32
    return %c0_i32, %c0_i32_0 : i32, i32
  }
  func.func @transform_4(%arg0: i32, %arg1: i32) -> (i32, i32, i32) {
    %c0_i32 = arith.constant 0 : i32
    %c0_i32_0 = arith.constant 0 : i32
    return %arg0, %c0_i32, %arg1 : i32, i32, i32
  }
}

module attributes {stable_mosaic.version = 11 : i64} {
  func.func @_mrf_kernel(%arg0: i32, %arg1: i32, %arg2: memref<1x4x128xbf16, #tpu.memory_space<vmem>>, %arg3: memref<1x4x128xbf16, #tpu.memory_space<vmem>>, %arg4: memref<4x12xbf16, #tpu.memory_space<vmem>>, %arg5: memref<4x1xf32, #tpu.memory_space<vmem>>, %arg6: memref<4x12xbf16, #tpu.memory_space<vmem>>, %arg7: memref<4x1xf32, #tpu.memory_space<vmem>>, %arg8: memref<4x12xbf16, #tpu.memory_space<vmem>>, %arg9: memref<4x1xf32, #tpu.memory_space<vmem>>, %arg10: memref<4x12xbf16, #tpu.memory_space<vmem>>, %arg11: memref<4x1xf32, #tpu.memory_space<vmem>>, %arg12: memref<4x20xbf16, #tpu.memory_space<vmem>>, %arg13: memref<4x1xf32, #tpu.memory_space<vmem>>, %arg14: memref<4x20xbf16, #tpu.memory_space<vmem>>, %arg15: memref<4x1xf32, #tpu.memory_space<vmem>>, %arg16: memref<1x4x128xf32, #tpu.memory_space<vmem>>) attributes {dimension_semantics = [#tpu.dimension_semantics<parallel>, #tpu.dimension_semantics<parallel>], iteration_bounds = array<i64: 2, 1>, scalar_prefetch = 0 : i64, scratch_operands = 0 : i64, tpu.core_type = #tpu.core_type<tc>, window_params = [{transform_indices = @transform_0, window_bounds = array<i64: 1, 4, 128>}, {transform_indices = @transform_1, window_bounds = array<i64: 1, 4, 128>}, {pipeline_mode = #tpu.pipeline_mode<synchronous>, transform_indices = @transform_2, window_bounds = array<i64: 4, 12>}, {pipeline_mode = #tpu.pipeline_mode<synchronous>, transform_indices = @transform_3, window_bounds = array<i64: 4, 1>}, {pipeline_mode = #tpu.pipeline_mode<synchronous>, transform_indices = @transform_4, window_bounds = array<i64: 4, 12>}, {pipeline_mode = #tpu.pipeline_mode<synchronous>, transform_indices = @transform_5, window_bounds = array<i64: 4, 1>}, {pipeline_mode = #tpu.pipeline_mode<synchronous>, transform_indices = @transform_6, window_bounds = array<i64: 4, 12>}, {pipeline_mode = #tpu.pipeline_mode<synchronous>, transform_indices = @transform_7, window_bounds = array<i64: 4, 1>}, {pipeline_mode = #tpu.pipeline_mode<synchronous>, transform_indices = @transform_8, window_bounds = array<i64: 4, 12>}, {pipeline_mode = #tpu.pipeline_mode<synchronous>, transform_indices = @transform_9, window_bounds = array<i64: 4, 1>}, {pipeline_mode = #tpu.pipeline_mode<synchronous>, transform_indices = @transform_10, window_bounds = array<i64: 4, 20>}, {pipeline_mode = #tpu.pipeline_mode<synchronous>, transform_indices = @transform_11, window_bounds = array<i64: 4, 1>}, {pipeline_mode = #tpu.pipeline_mode<synchronous>, transform_indices = @transform_12, window_bounds = array<i64: 4, 20>}, {pipeline_mode = #tpu.pipeline_mode<synchronous>, transform_indices = @transform_13, window_bounds = array<i64: 4, 1>}, {transform_indices = @transform_14, window_bounds = array<i64: 1, 4, 128>}]} {
    %c0 = arith.constant 0 : index
    %c0_0 = arith.constant 0 : index
    %c0_1 = arith.constant 0 : index
    %0 = vector.load %arg2[%c0, %c0_0, %c0_1] : memref<1x4x128xbf16, #tpu.memory_space<vmem>>, vector<1x4x128xbf16>
    %1 = vector.shape_cast %0 : vector<1x4x128xbf16> to vector<4x128xbf16>
    %c0_2 = arith.constant 0 : index
    %c0_3 = arith.constant 0 : index
    %c0_4 = arith.constant 0 : index
    %2 = vector.load %arg3[%c0_2, %c0_3, %c0_4] : memref<1x4x128xbf16, #tpu.memory_space<vmem>>, vector<1x4x128xbf16>
    %3 = vector.shape_cast %2 : vector<1x4x128xbf16> to vector<4x128xbf16>
    %4 = tpu.concatenate %1, %3 in 1 : vector<4x128xbf16>, vector<4x128xbf16> -> vector<4x256xbf16>
    %5 = arith.extf %4 : vector<4x256xbf16> to vector<4x256xf32>
    %cst = arith.constant 0.000000e+00 : f32
    %6 = vector.broadcast %cst : f32 to vector<4x256xf32>
    %7 = arith.cmpf ogt, %5, %6 : vector<4x256xf32>
    %cst_5 = arith.constant 0.00999999977 : f32
    %8 = vector.broadcast %cst_5 : f32 to vector<4x256xf32>
    %9 = arith.mulf %8, %5 : vector<4x256xf32>
    %10 = arith.select %7, %5, %9 : vector<4x256xi1>, vector<4x256xf32>
    %11 = arith.truncf %10 : vector<4x256xf32> to vector<4x256xbf16>
    %cst_6 = arith.constant 0.000000e+00 : f32
    %12 = vector.broadcast %cst_6 : f32 to vector<4x128xf32>
    %13 = vector.extract_strided_slice %11 {offsets = [0, 2], sizes = [4, 130], strides = [1, 1]} : vector<4x256xbf16> to vector<4x130xbf16>
    %14 = vector.extract_strided_slice %11 {offsets = [0, 3], sizes = [4, 130], strides = [1, 1]} : vector<4x256xbf16> to vector<4x130xbf16>
    %15 = vector.extract_strided_slice %11 {offsets = [0, 4], sizes = [4, 130], strides = [1, 1]} : vector<4x256xbf16> to vector<4x130xbf16>
    %16 = tpu.concatenate %13, %14, %15 in 0 : vector<4x130xbf16>, vector<4x130xbf16>, vector<4x130xbf16> -> vector<12x130xbf16>
    %c0_7 = arith.constant 0 : index
    %c0_8 = arith.constant 0 : index
    %17 = vector.load %arg4[%c0_7, %c0_8] : memref<4x12xbf16, #tpu.memory_space<vmem>>, vector<4x12xbf16>
    %cst_9 = arith.constant dense<0.000000e+00> : vector<4x130xf32>
    %18 = tpu.matmul %17, %16, %cst_9 {dimension_numbers = #tpu.dot_dimension_numbers<[1], [0], [0], [1], [0, 0, 1, 1], [], []>} : vector<4x12xbf16>, vector<12x130xbf16>, vector<4x130xf32> -> vector<4x130xf32>
    %c0_10 = arith.constant 0 : index
    %c0_11 = arith.constant 0 : index
    %19 = vector.load %arg5[%c0_10, %c0_11] : memref<4x1xf32, #tpu.memory_space<vmem>>, vector<4x1xf32>
    %20 = vector.broadcast %19 : vector<4x1xf32> to vector<4x130xf32>
    %21 = arith.addf %18, %20 : vector<4x130xf32>
    %cst_12 = arith.constant 0.000000e+00 : f32
    %22 = vector.broadcast %cst_12 : f32 to vector<4x130xf32>
    %23 = arith.cmpf ogt, %21, %22 : vector<4x130xf32>
    %cst_13 = arith.constant 0.00999999977 : f32
    %24 = vector.broadcast %cst_13 : f32 to vector<4x130xf32>
    %25 = arith.mulf %24, %21 : vector<4x130xf32>
    %26 = arith.select %23, %21, %25 : vector<4x130xi1>, vector<4x130xf32>
    %c128_i32 = arith.constant 128 : i32
    %27 = arith.muli %arg1, %c128_i32 : i32
    %c1_i32 = arith.constant 1 : i32
    %28 = arith.subi %27, %c1_i32 : i32
    %29 = tpu.iota {dimensions = array<i32: 1>} : vector<1x130xi32>
    %30 = vector.broadcast %28 : i32 to vector<1x130xi32>
    %31 = arith.addi %30, %29 : vector<1x130xi32>
    %c0_i32 = arith.constant 0 : i32
    %32 = vector.broadcast %c0_i32 : i32 to vector<1x130xi32>
    %33 = arith.cmpi sge, %31, %32 : vector<1x130xi32>
    %c32_i32 = arith.constant 32 : i32
    %34 = vector.broadcast %c32_i32 : i32 to vector<1x130xi32>
    %35 = arith.cmpi slt, %31, %34 : vector<1x130xi32>
    %36 = arith.andi %33, %35 : vector<1x130xi1>
    %cst_14 = arith.constant 0.000000e+00 : f32
    %37 = vector.shape_cast %36 : vector<1x130xi1> to vector<1x130xi1>
    %38 = vector.broadcast %37 : vector<1x130xi1> to vector<4x130xi1>
    %39 = vector.broadcast %cst_14 : f32 to vector<4x130xf32>
    %40 = arith.select %38, %26, %39 : vector<4x130xi1>, vector<4x130xf32>
    %41 = arith.truncf %40 : vector<4x130xf32> to vector<4x130xbf16>
    %42 = vector.extract_strided_slice %41 {offsets = [0, 0], sizes = [4, 128], strides = [1, 1]} : vector<4x130xbf16> to vector<4x128xbf16>
    %43 = vector.extract_strided_slice %41 {offsets = [0, 1], sizes = [4, 128], strides = [1, 1]} : vector<4x130xbf16> to vector<4x128xbf16>
    %44 = vector.extract_strided_slice %41 {offsets = [0, 2], sizes = [4, 128], strides = [1, 1]} : vector<4x130xbf16> to vector<4x128xbf16>
    %45 = tpu.concatenate %42, %43, %44 in 0 : vector<4x128xbf16>, vector<4x128xbf16>, vector<4x128xbf16> -> vector<12x128xbf16>
    %c0_15 = arith.constant 0 : index
    %c0_16 = arith.constant 0 : index
    %46 = vector.load %arg6[%c0_15, %c0_16] : memref<4x12xbf16, #tpu.memory_space<vmem>>, vector<4x12xbf16>
    %cst_17 = arith.constant dense<0.000000e+00> : vector<4x128xf32>
    %47 = tpu.matmul %46, %45, %cst_17 {dimension_numbers = #tpu.dot_dimension_numbers<[1], [0], [0], [1], [0, 0, 1, 1], [], []>} : vector<4x12xbf16>, vector<12x128xbf16>, vector<4x128xf32> -> vector<4x128xf32>
    %c0_18 = arith.constant 0 : index
    %c0_19 = arith.constant 0 : index
    %48 = vector.load %arg7[%c0_18, %c0_19] : memref<4x1xf32, #tpu.memory_space<vmem>>, vector<4x1xf32>
    %49 = vector.broadcast %48 : vector<4x1xf32> to vector<4x128xf32>
    %50 = arith.addf %47, %49 : vector<4x128xf32>
    %51 = arith.addf %12, %50 : vector<4x128xf32>
    %52 = vector.extract_strided_slice %11 {offsets = [0, 0], sizes = [4, 130], strides = [1, 1]} : vector<4x256xbf16> to vector<4x130xbf16>
    %53 = vector.extract_strided_slice %11 {offsets = [0, 3], sizes = [4, 130], strides = [1, 1]} : vector<4x256xbf16> to vector<4x130xbf16>
    %54 = vector.extract_strided_slice %11 {offsets = [0, 6], sizes = [4, 130], strides = [1, 1]} : vector<4x256xbf16> to vector<4x130xbf16>
    %55 = tpu.concatenate %52, %53, %54 in 0 : vector<4x130xbf16>, vector<4x130xbf16>, vector<4x130xbf16> -> vector<12x130xbf16>
    %c0_20 = arith.constant 0 : index
    %c0_21 = arith.constant 0 : index
    %56 = vector.load %arg8[%c0_20, %c0_21] : memref<4x12xbf16, #tpu.memory_space<vmem>>, vector<4x12xbf16>
    %cst_22 = arith.constant dense<0.000000e+00> : vector<4x130xf32>
    %57 = tpu.matmul %56, %55, %cst_22 {dimension_numbers = #tpu.dot_dimension_numbers<[1], [0], [0], [1], [0, 0, 1, 1], [], []>} : vector<4x12xbf16>, vector<12x130xbf16>, vector<4x130xf32> -> vector<4x130xf32>
    %c0_23 = arith.constant 0 : index
    %c0_24 = arith.constant 0 : index
    %58 = vector.load %arg9[%c0_23, %c0_24] : memref<4x1xf32, #tpu.memory_space<vmem>>, vector<4x1xf32>
    %59 = vector.broadcast %58 : vector<4x1xf32> to vector<4x130xf32>
    %60 = arith.addf %57, %59 : vector<4x130xf32>
    %cst_25 = arith.constant 0.000000e+00 : f32
    %61 = vector.broadcast %cst_25 : f32 to vector<4x130xf32>
    %62 = arith.cmpf ogt, %60, %61 : vector<4x130xf32>
    %cst_26 = arith.constant 0.00999999977 : f32
    %63 = vector.broadcast %cst_26 : f32 to vector<4x130xf32>
    %64 = arith.mulf %63, %60 : vector<4x130xf32>
    %65 = arith.select %62, %60, %64 : vector<4x130xi1>, vector<4x130xf32>
    %c128_i32_27 = arith.constant 128 : i32
    %66 = arith.muli %arg1, %c128_i32_27 : i32
    %c1_i32_28 = arith.constant 1 : i32
    %67 = arith.subi %66, %c1_i32_28 : i32
    %68 = tpu.iota {dimensions = array<i32: 1>} : vector<1x130xi32>
    %69 = vector.broadcast %67 : i32 to vector<1x130xi32>
    %70 = arith.addi %69, %68 : vector<1x130xi32>
    %c0_i32_29 = arith.constant 0 : i32
    %71 = vector.broadcast %c0_i32_29 : i32 to vector<1x130xi32>
    %72 = arith.cmpi sge, %70, %71 : vector<1x130xi32>
    %c32_i32_30 = arith.constant 32 : i32
    %73 = vector.broadcast %c32_i32_30 : i32 to vector<1x130xi32>
    %74 = arith.cmpi slt, %70, %73 : vector<1x130xi32>
    %75 = arith.andi %72, %74 : vector<1x130xi1>
    %cst_31 = arith.constant 0.000000e+00 : f32
    %76 = vector.shape_cast %75 : vector<1x130xi1> to vector<1x130xi1>
    %77 = vector.broadcast %76 : vector<1x130xi1> to vector<4x130xi1>
    %78 = vector.broadcast %cst_31 : f32 to vector<4x130xf32>
    %79 = arith.select %77, %65, %78 : vector<4x130xi1>, vector<4x130xf32>
    %80 = arith.truncf %79 : vector<4x130xf32> to vector<4x130xbf16>
    %81 = vector.extract_strided_slice %80 {offsets = [0, 0], sizes = [4, 128], strides = [1, 1]} : vector<4x130xbf16> to vector<4x128xbf16>
    %82 = vector.extract_strided_slice %80 {offsets = [0, 1], sizes = [4, 128], strides = [1, 1]} : vector<4x130xbf16> to vector<4x128xbf16>
    %83 = vector.extract_strided_slice %80 {offsets = [0, 2], sizes = [4, 128], strides = [1, 1]} : vector<4x130xbf16> to vector<4x128xbf16>
    %84 = tpu.concatenate %81, %82, %83 in 0 : vector<4x128xbf16>, vector<4x128xbf16>, vector<4x128xbf16> -> vector<12x128xbf16>
    %c0_32 = arith.constant 0 : index
    %c0_33 = arith.constant 0 : index
    %85 = vector.load %arg10[%c0_32, %c0_33] : memref<4x12xbf16, #tpu.memory_space<vmem>>, vector<4x12xbf16>
    %cst_34 = arith.constant dense<0.000000e+00> : vector<4x128xf32>
    %86 = tpu.matmul %85, %84, %cst_34 {dimension_numbers = #tpu.dot_dimension_numbers<[1], [0], [0], [1], [0, 0, 1, 1], [], []>} : vector<4x12xbf16>, vector<12x128xbf16>, vector<4x128xf32> -> vector<4x128xf32>
    %c0_35 = arith.constant 0 : index
    %c0_36 = arith.constant 0 : index
    %87 = vector.load %arg11[%c0_35, %c0_36] : memref<4x1xf32, #tpu.memory_space<vmem>>, vector<4x1xf32>
    %88 = vector.broadcast %87 : vector<4x1xf32> to vector<4x128xf32>
    %89 = arith.addf %86, %88 : vector<4x128xf32>
    %90 = arith.addf %51, %89 : vector<4x128xf32>
    %91 = vector.extract_strided_slice %11 {offsets = [0, 0], sizes = [4, 132], strides = [1, 1]} : vector<4x256xbf16> to vector<4x132xbf16>
    %92 = vector.extract_strided_slice %11 {offsets = [0, 1], sizes = [4, 132], strides = [1, 1]} : vector<4x256xbf16> to vector<4x132xbf16>
    %93 = vector.extract_strided_slice %11 {offsets = [0, 2], sizes = [4, 132], strides = [1, 1]} : vector<4x256xbf16> to vector<4x132xbf16>
    %94 = vector.extract_strided_slice %11 {offsets = [0, 3], sizes = [4, 132], strides = [1, 1]} : vector<4x256xbf16> to vector<4x132xbf16>
    %95 = vector.extract_strided_slice %11 {offsets = [0, 4], sizes = [4, 132], strides = [1, 1]} : vector<4x256xbf16> to vector<4x132xbf16>
    %96 = tpu.concatenate %91, %92, %93, %94, %95 in 0 : vector<4x132xbf16>, vector<4x132xbf16>, vector<4x132xbf16>, vector<4x132xbf16>, vector<4x132xbf16> -> vector<20x132xbf16>
    %c0_37 = arith.constant 0 : index
    %c0_38 = arith.constant 0 : index
    %97 = vector.load %arg12[%c0_37, %c0_38] : memref<4x20xbf16, #tpu.memory_space<vmem>>, vector<4x20xbf16>
    %cst_39 = arith.constant dense<0.000000e+00> : vector<4x132xf32>
    %98 = tpu.matmul %97, %96, %cst_39 {dimension_numbers = #tpu.dot_dimension_numbers<[1], [0], [0], [1], [0, 0, 1, 1], [], []>} : vector<4x20xbf16>, vector<20x132xbf16>, vector<4x132xf32> -> vector<4x132xf32>
    %c0_40 = arith.constant 0 : index
    %c0_41 = arith.constant 0 : index
    %99 = vector.load %arg13[%c0_40, %c0_41] : memref<4x1xf32, #tpu.memory_space<vmem>>, vector<4x1xf32>
    %100 = vector.broadcast %99 : vector<4x1xf32> to vector<4x132xf32>
    %101 = arith.addf %98, %100 : vector<4x132xf32>
    %cst_42 = arith.constant 0.000000e+00 : f32
    %102 = vector.broadcast %cst_42 : f32 to vector<4x132xf32>
    %103 = arith.cmpf ogt, %101, %102 : vector<4x132xf32>
    %cst_43 = arith.constant 0.00999999977 : f32
    %104 = vector.broadcast %cst_43 : f32 to vector<4x132xf32>
    %105 = arith.mulf %104, %101 : vector<4x132xf32>
    %106 = arith.select %103, %101, %105 : vector<4x132xi1>, vector<4x132xf32>
    %c128_i32_44 = arith.constant 128 : i32
    %107 = arith.muli %arg1, %c128_i32_44 : i32
    %c2_i32 = arith.constant 2 : i32
    %108 = arith.subi %107, %c2_i32 : i32
    %109 = tpu.iota {dimensions = array<i32: 1>} : vector<1x132xi32>
    %110 = vector.broadcast %108 : i32 to vector<1x132xi32>
    %111 = arith.addi %110, %109 : vector<1x132xi32>
    %c0_i32_45 = arith.constant 0 : i32
    %112 = vector.broadcast %c0_i32_45 : i32 to vector<1x132xi32>
    %113 = arith.cmpi sge, %111, %112 : vector<1x132xi32>
    %c32_i32_46 = arith.constant 32 : i32
    %114 = vector.broadcast %c32_i32_46 : i32 to vector<1x132xi32>
    %115 = arith.cmpi slt, %111, %114 : vector<1x132xi32>
    %116 = arith.andi %113, %115 : vector<1x132xi1>
    %cst_47 = arith.constant 0.000000e+00 : f32
    %117 = vector.shape_cast %116 : vector<1x132xi1> to vector<1x132xi1>
    %118 = vector.broadcast %117 : vector<1x132xi1> to vector<4x132xi1>
    %119 = vector.broadcast %cst_47 : f32 to vector<4x132xf32>
    %120 = arith.select %118, %106, %119 : vector<4x132xi1>, vector<4x132xf32>
    %121 = arith.truncf %120 : vector<4x132xf32> to vector<4x132xbf16>
    %122 = vector.extract_strided_slice %121 {offsets = [0, 0], sizes = [4, 128], strides = [1, 1]} : vector<4x132xbf16> to vector<4x128xbf16>
    %123 = vector.extract_strided_slice %121 {offsets = [0, 1], sizes = [4, 128], strides = [1, 1]} : vector<4x132xbf16> to vector<4x128xbf16>
    %124 = vector.extract_strided_slice %121 {offsets = [0, 2], sizes = [4, 128], strides = [1, 1]} : vector<4x132xbf16> to vector<4x128xbf16>
    %125 = vector.extract_strided_slice %121 {offsets = [0, 3], sizes = [4, 128], strides = [1, 1]} : vector<4x132xbf16> to vector<4x128xbf16>
    %126 = vector.extract_strided_slice %121 {offsets = [0, 4], sizes = [4, 128], strides = [1, 1]} : vector<4x132xbf16> to vector<4x128xbf16>
    %127 = tpu.concatenate %122, %123, %124, %125, %126 in 0 : vector<4x128xbf16>, vector<4x128xbf16>, vector<4x128xbf16>, vector<4x128xbf16>, vector<4x128xbf16> -> vector<20x128xbf16>
    %c0_48 = arith.constant 0 : index
    %c0_49 = arith.constant 0 : index
    %128 = vector.load %arg14[%c0_48, %c0_49] : memref<4x20xbf16, #tpu.memory_space<vmem>>, vector<4x20xbf16>
    %cst_50 = arith.constant dense<0.000000e+00> : vector<4x128xf32>
    %129 = tpu.matmul %128, %127, %cst_50 {dimension_numbers = #tpu.dot_dimension_numbers<[1], [0], [0], [1], [0, 0, 1, 1], [], []>} : vector<4x20xbf16>, vector<20x128xbf16>, vector<4x128xf32> -> vector<4x128xf32>
    %c0_51 = arith.constant 0 : index
    %c0_52 = arith.constant 0 : index
    %130 = vector.load %arg15[%c0_51, %c0_52] : memref<4x1xf32, #tpu.memory_space<vmem>>, vector<4x1xf32>
    %131 = vector.broadcast %130 : vector<4x1xf32> to vector<4x128xf32>
    %132 = arith.addf %129, %131 : vector<4x128xf32>
    %133 = arith.addf %90, %132 : vector<4x128xf32>
    %c0_53 = arith.constant 0 : index
    %c0_54 = arith.constant 0 : index
    %c0_55 = arith.constant 0 : index
    %134 = vector.load %arg16[%c0_53, %c0_54, %c0_55] : memref<1x4x128xf32, #tpu.memory_space<vmem>>, vector<1x4x128xf32>
    %135 = vector.shape_cast %134 : vector<1x4x128xf32> to vector<4x128xf32>
    %136 = vector.shape_cast %133 : vector<4x128xf32> to vector<1x4x128xf32>
    tpu.vector_store %arg16[%c0_53, %c0_54, %c0_55], %136 {strides = array<i32>} : memref<1x4x128xf32, #tpu.memory_space<vmem>>, vector<1x4x128xf32>,
    return
  }
  func.func @transform_0(%arg0: i32, %arg1: i32) -> (i32, i32, i32) {
    %c0_i32 = arith.constant 0 : i32
    %c0_i32_0 = arith.constant 0 : i32
    return %arg0, %c0_i32, %arg1 : i32, i32, i32
  }
  func.func @transform_1(%arg0: i32, %arg1: i32) -> (i32, i32, i32) {
    %c1_i32 = arith.constant 1 : i32
    %0 = arith.addi %arg1, %c1_i32 : i32
    %c1_i32_0 = arith.constant 1 : i32
    %1 = arith.muli %0, %c1_i32_0 : i32
    %c0_i32 = arith.constant 0 : i32
    %c0_i32_1 = arith.constant 0 : i32
    return %arg0, %c0_i32, %1 : i32, i32, i32
  }
  func.func @transform_2(%arg0: i32, %arg1: i32) -> (i32, i32) {
    %c0_i32 = arith.constant 0 : i32
    %c0_i32_0 = arith.constant 0 : i32
    %c0_i32_1 = arith.constant 0 : i32
    return %c0_i32, %c0_i32_0 : i32, i32
  }
  func.func @transform_3(%arg0: i32, %arg1: i32) -> (i32, i32) {
    %c0_i32 = arith.constant 0 : i32
    %c0_i32_0 = arith.constant 0 : i32
    %c0_i32_1 = arith.constant 0 : i32
    return %c0_i32, %c0_i32_0 : i32, i32
  }
  func.func @transform_4(%arg0: i32, %arg1: i32) -> (i32, i32) {
    %c0_i32 = arith.constant 0 : i32
    %c0_i32_0 = arith.constant 0 : i32
    %c0_i32_1 = arith.constant 0 : i32
    return %c0_i32, %c0_i32_0 : i32, i32
  }
  func.func @transform_5(%arg0: i32, %arg1: i32) -> (i32, i32) {
    %c0_i32 = arith.constant 0 : i32
    %c0_i32_0 = arith.constant 0 : i32
    %c0_i32_1 = arith.constant 0 : i32
    return %c0_i32, %c0_i32_0 : i32, i32
  }
  func.func @transform_6(%arg0: i32, %arg1: i32) -> (i32, i32) {
    %c0_i32 = arith.constant 0 : i32
    %c0_i32_0 = arith.constant 0 : i32
    %c0_i32_1 = arith.constant 0 : i32
    return %c0_i32, %c0_i32_0 : i32, i32
  }
  func.func @transform_7(%arg0: i32, %arg1: i32) -> (i32, i32) {
    %c0_i32 = arith.constant 0 : i32
    %c0_i32_0 = arith.constant 0 : i32
    %c0_i32_1 = arith.constant 0 : i32
    return %c0_i32, %c0_i32_0 : i32, i32
  }
  func.func @transform_8(%arg0: i32, %arg1: i32) -> (i32, i32) {
    %c0_i32 = arith.constant 0 : i32
    %c0_i32_0 = arith.constant 0 : i32
    %c0_i32_1 = arith.constant 0 : i32
    return %c0_i32, %c0_i32_0 : i32, i32
  }
  func.func @transform_9(%arg0: i32, %arg1: i32) -> (i32, i32) {
    %c0_i32 = arith.constant 0 : i32
    %c0_i32_0 = arith.constant 0 : i32
    %c0_i32_1 = arith.constant 0 : i32
    return %c0_i32, %c0_i32_0 : i32, i32
  }
  func.func @transform_10(%arg0: i32, %arg1: i32) -> (i32, i32) {
    %c0_i32 = arith.constant 0 : i32
    %c0_i32_0 = arith.constant 0 : i32
    %c0_i32_1 = arith.constant 0 : i32
    return %c0_i32, %c0_i32_0 : i32, i32
  }
  func.func @transform_11(%arg0: i32, %arg1: i32) -> (i32, i32) {
    %c0_i32 = arith.constant 0 : i32
    %c0_i32_0 = arith.constant 0 : i32
    %c0_i32_1 = arith.constant 0 : i32
    return %c0_i32, %c0_i32_0 : i32, i32
  }
  func.func @transform_12(%arg0: i32, %arg1: i32) -> (i32, i32) {
    %c0_i32 = arith.constant 0 : i32
    %c0_i32_0 = arith.constant 0 : i32
    %c0_i32_1 = arith.constant 0 : i32
    return %c0_i32, %c0_i32_0 : i32, i32
  }
  func.func @transform_13(%arg0: i32, %arg1: i32) -> (i32, i32) {
    %c0_i32 = arith.constant 0 : i32
    %c0_i32_0 = arith.constant 0 : i32
    %c0_i32_1 = arith.constant 0 : i32
    return %c0_i32, %c0_i32_0 : i32, i32
  }
  func.func @transform_14(%arg0: i32, %arg1: i32) -> (i32, i32, i32) {
    %c0_i32 = arith.constant 0 : i32
    %c0_i32_0 = arith.constant 0 : i32
    return %arg0, %c0_i32, %arg1 : i32, i32, i32
  }
}

</mosaic_0001>

<llo_original>
// kernel: tile.8
$region0: #{tile.8}
  #allocation0 [shape = 's32[1]{0}', space=sflag, size = 0x4, scoped, tag = 'scoped memory for tile.8']
  %s0 = inlined_call_operand.vmem [shape: f32[4], index: 0, kind: input, shape index: {}]
  %s1 = inlined_call_operand.vmem [shape: f32[2,4], index: 1, kind: output, shape index: {}]
  // Predicated region
  $region2: #{tile.8} parent=0 // pred_check
    _
  $region3: #{tile.8} parent=0 // pred_check_branch
    %3 = sbr.rel (0) target = $region5
  $region4: #{tile.8} parent=0 // pred_region
    _
  $region5: #{tile.8} parent=0 // pred_fallthru
    _
  %v4 = vld [vmem:[%s0] ss:$0 sm:$0xff]
  %5 = vst [vmem:[%s1] sm:$0x3] %v4

// kernel: tile.0
$region0: #{tile.0}
  %s0 = inlined_call_operand.vmem [shape: f32[2,4], index: 0, kind: input, shape index: {}]
  %s1 = inlined_call_operand.hbm [shape: f32[8,1], index: 1, kind: output, shape index: {}]
  $region1: #{tile.0} parent=0
    #allocation0 [shape = 'u8[4096]{0}', space=vmem, size = 0x1000, scoped, tag = 'operand span for operand 1']
    #allocation1 [shape = 's32[1]{0}', space=sflag, size = 0x4, scoped, tag = 'scoped memory for tile.0']
    #allocation2 [shape = 'u8[4096]{0}', space=vmem, size = 0x1000, scoped, tag = 'scoped mem for input reshape']
    %2 = vsyncpa [#allocation1], 0
    %s4 = sshllo.u32 0, 2
    %v5 = vld [vmem:[%s0] sm:%s4]
    %6 = vst [vmem:[#allocation2] sm:%s4] %v5
    %v7 = vld [vmem:[#allocation2] sm:$0x3]
    %vm8 = vcmask 7168
    %9 = vst.msk [vmem:[#allocation0] ss:$4 sm:$0x3] %vm8, %v7
    %v10 = vld [vmem:[#allocation2] sm:$0x3]
    %11 = vrot.lane.b32.xlu0 %v10, 127
    %v12 = vpop.permute.xlu0 %11
    %vm13 = vcmask 7168
    %s14 = scalar_lea.vmem [#allocation0], 1
    %15 = vst.msk [vmem:[%s14] ss:$4 sm:$0x3] %vm13, %v12
    %v16 = vld [vmem:[#allocation2] sm:$0x3]
    %17 = vrot.lane.b32.xlu0 %v16, 126
    %v18 = vpop.permute.xlu0 %17
    %vm19 = vcmask 7168
    %s20 = scalar_lea.vmem [#allocation0], 2
    %21 = vst.msk [vmem:[%s20] ss:$4 sm:$0x3] %vm19, %v18
    %v22 = vld [vmem:[#allocation2] sm:$0x3]
    %23 = vrot.lane.b32.xlu0 %v22, 125
    %v24 = vpop.permute.xlu0 %23
    %vm25 = vcmask 7168
    %s26 = scalar_lea.vmem [#allocation0], 3
    %27 = vst.msk [vmem:[%s26] ss:$4 sm:$0x3] %vm25, %v24
    %s29 = ssub.s32 128, 128
    %30 = vsyncadd [#allocation1], %s29
    %s32 = sshll.u32 [#allocation0], 4
    %s33 = int_to_ptr.vmem [resolvable:$true] %s32
    %35 = dma.vmem_to_hbm [thread:$0]  %s33, 128, %s1, [#allocation1]
    %36 = dma.done [#allocation1], 128
    %37 = vsyncpa [#allocation1], 1

// kernel: generator_block_apply.2
$region0: #{generator_block_apply.2}
  #allocation0 [shape = 'u32[]', space=smem, size = 0x4, offset = 0x4, fixed_abs, tag = 'smem constant byte address 0x4 - core index']
  #allocation1 [shape = 'u32[144,128]{1,0:T(1,128)}', space=vmem, size = 0x12000, scoped, tag = 'internal scratch']
  %s0 = inlined_call_operand.hbm [shape: bf16[2,8,256], index: 0, kind: input, shape index: {}, may-alias: {0,1}]
  %s1 = inlined_call_operand.hbm [shape: bf16[2,8,256], index: 1, kind: input, shape index: {}, may-alias: {0,1}]
  %s2 = inlined_call_operand.hbm [shape: bf16[8,16], index: 2, kind: input, shape index: {}]
  %s3 = inlined_call_operand.hbm [shape: f32[8,1], index: 3, kind: input, shape index: {}]
  %s4 = inlined_call_operand.hbm [shape: bf16[2,8,128], index: 4, kind: output, shape index: {}]
  %s5 = sld [smem:[#allocation0]]
  $region65: #{generator_block_apply.2} parent=0
    _
  %s7 = ssub.s32 1, %s5
  %s8 = scalar_select 0, %s7, %s5
  $region1: #{generator_block_apply.2} parent=0
    #allocation2 [shape = 'u8[4096]{0}', space=vmem, size = 0x1000, scoped, tag = 'input window, operand 0']
    #allocation3 [shape = 's32[2]{0}', space=sflag, size = 0x8, scoped, tag = 'scoped memory for generator_block_apply.2']
    #allocation4 [shape = 's32[2]{0}', space=sflag, size = 0x8, scoped, tag = 'scoped memory for generator_block_apply.2']
    #allocation5 [shape = 'u8[4096]{0}', space=vmem, size = 0x1000, scoped, tag = 'input window, operand 1']
    #allocation6 [shape = 's32[2]{0}', space=sflag, size = 0x8, scoped, tag = 'scoped memory for generator_block_apply.2']
    #allocation7 [shape = 'u8[2048]{0}', space=vmem, size = 0x800, scoped, tag = 'input window, operand 2, single buffered']
    #allocation8 [shape = 'u8[4096]{0}', space=vmem, size = 0x1000, scoped, tag = 'input window, operand 3, single buffered']
    #allocation9 [shape = 's32[1]{0}', space=sflag, size = 0x4, scoped, tag = 'scoped memory for generator_block_apply.2']
    #allocation10 [shape = 'u8[4096]{0}', space=vmem, size = 0x1000, scoped, tag = 'output window, operand 0']
    %9 = vsyncpa [#allocation3], 0
    %s10 = scalar_lea.sflag [#allocation3], 1
    %11 = vsyncpa %s10, 0
    %12 = vsyncpa [#allocation6], 0
    %s13 = scalar_lea.sflag [#allocation6], 1
    %14 = vsyncpa %s13, 0
    %15 = vsyncpa [#allocation9], 0
    %16 = vsyncpa [#allocation4], 0
    %s17 = scalar_lea.sflag [#allocation4], 1
    %18 = vsyncpa %s17, 0
    loop: start=0, step=1, limit=4
    $region2: #{generator_block_apply.2} parent=1 // loop_pre_header
      _
    $region3: #{generator_block_apply.2} parent=1 // loop_header
      %s20 = sphi 0, %s24
      %p21 = scmp.ge.s32.totalorder %s20, 4
      %s27 = sphi 0, %s39
      %s28 = sphi 0, %s35
      %s29 = sphi 0, %s27
      %s30 = sphi 0, %s28
      %s31 = sphi 0, %s29
      %s32 = sphi 0, %s30
      %s44 = sphi 0, %s46
      %s47 = sphi 0, %s44
      %s48 = sphi 0, %s47
      %s64 = sphi 0, %s48
      %s74 = sphi 0, %s76
      %s77 = sphi 0, %s74
      %s78 = sphi 0, %s77
      %s94 = sphi 0, %s78
      %s98 = sphi 0, %s98
      %s100 = sphi 0, %s98
      %s101 = sphi 0, %s100
      %s115 = sphi 0, %s101
      %s119 = sphi 0, %s119
      %s121 = sphi 0, %s119
      %s122 = sphi 0, %s121
      %s136 = sphi 0, %s122
      %s144 = sphi 0, %s146
      %s147 = sphi 0, %s144
      %s148 = sphi 0, %s147
      %s164 = sphi 0, %s148
    $region4: #{generator_block_apply.2} parent=1 // loop_header_branch
      %23 = sbr.rel (%p21) target = $region8
    $region5: #{generator_block_apply.2} parent=1 // loop_body
      %s25 = ssub.s32 %s20, 1
      %s26 = ssub.s32 %s20, 2
      %s33 = sadd.s32 1, %s28
      %p34 = scmp.ge.s32.totalorder %s33, 1
      %s35 = scalar_select %p34, 0, %s33
      %s36 = sadd.s32 1, %s27
      %s37 = scalar_select %p34, %s36, %s27
      %p38 = scmp.ge.s32.totalorder %s37, 2
      %s39 = scalar_select %p38, 0, %s37
      %s40 = ssub.s32 %s27, %s39
      %s41 = ssub.s32 %s28, %s35
      %s42 = sor.u32 %s40, %s41
      %p43 = scmp.eq.s32.totalorder %s42, 0
      %s45 = sadd.s32 %s44, 1
      %s46 = scalar_select %p43, %s44, %s45
      %p49 = pneg %p43
      %p50 = scmp.eq.s32.totalorder %s20, 1
      %p51 = por %p49, %p50
      %p52 = scmp.ne.s32.totalorder %s44, %s47
      %p53 = scmp.eq.s32.totalorder %s20, 0
      %p54 = por %p52, %p53
      %p55 = scmp.ne.s32.totalorder %s44, %s47
      %p56 = scmp.eq.s32.totalorder %s25, 1
      %p57 = por %p55, %p56
      %p58 = scmp.ne.s32.totalorder %s47, %s48
      %p59 = scmp.eq.s32.totalorder %s25, 0
      %p60 = por %p58, %p59
      %p61 = scmp.ne.s32.totalorder %s47, %s48
      %p62 = scmp.eq.s32.totalorder %s26, 1
      %p63 = por %p61, %p62
      %p65 = scmp.ne.s32.totalorder %s48, %s64
      %p66 = scmp.eq.s32.totalorder %s26, 0
      %p67 = por %p65, %p66
      %s68 = sadd.s32 %s28, 1
      %s69 = sadd.s32 %s35, 1
      %s70 = ssub.s32 %s27, %s39
      %s71 = ssub.s32 %s68, %s69
      %s72 = sor.u32 %s70, %s71
      %p73 = scmp.eq.s32.totalorder %s72, 0
      %s75 = sadd.s32 %s74, 1
      %s76 = scalar_select %p73, %s74, %s75
      %p79 = pneg %p73
      %p80 = scmp.eq.s32.totalorder %s20, 1
      %p81 = por %p79, %p80
      %p82 = scmp.ne.s32.totalorder %s74, %s77
      %p83 = scmp.eq.s32.totalorder %s20, 0
      %p84 = por %p82, %p83
      %p85 = scmp.ne.s32.totalorder %s74, %s77
      %p86 = scmp.eq.s32.totalorder %s25, 1
      %p87 = por %p85, %p86
      %p88 = scmp.ne.s32.totalorder %s77, %s78
      %p89 = scmp.eq.s32.totalorder %s25, 0
      %p90 = por %p88, %p89
      %p91 = scmp.ne.s32.totalorder %s77, %s78
      %p92 = scmp.eq.s32.totalorder %s26, 1
      %p93 = por %p91, %p92
      %p95 = scmp.ne.s32.totalorder %s78, %s94
      %p96 = scmp.eq.s32.totalorder %s26, 0
      %p97 = por %p95, %p96
      %s99 = sadd.s32 %s98, 1
      %p102 = scmp.eq.s32.totalorder %s20, 1
      %p103 = scmp.ne.s32.totalorder %s98, %s100
      %p104 = scmp.eq.s32.totalorder %s20, 0
      %p105 = por %p103, %p104
      %p106 = scmp.ne.s32.totalorder %s98, %s100
      %p107 = scmp.eq.s32.totalorder %s25, 1
      %p108 = por %p106, %p107
      %p109 = scmp.ne.s32.totalorder %s100, %s101
      %p110 = scmp.eq.s32.totalorder %s25, 0
      %p111 = por %p109, %p110
      %p112 = scmp.ne.s32.totalorder %s100, %s101
      %p113 = scmp.eq.s32.totalorder %s26, 1
      %p114 = por %p112, %p113
      %p116 = scmp.ne.s32.totalorder %s101, %s115
      %p117 = scmp.eq.s32.totalorder %s26, 0
      %p118 = por %p116, %p117
      %s120 = sadd.s32 %s119, 1
      %p123 = scmp.eq.s32.totalorder %s20, 1
      %p124 = scmp.ne.s32.totalorder %s119, %s121
      %p125 = scmp.eq.s32.totalorder %s20, 0
      %p126 = por %p124, %p125
      %p127 = scmp.ne.s32.totalorder %s119, %s121
      %p128 = scmp.eq.s32.totalorder %s25, 1
      %p129 = por %p127, %p128
      %p130 = scmp.ne.s32.totalorder %s121, %s122
      %p131 = scmp.eq.s32.totalorder %s25, 0
      %p132 = por %p130, %p131
      %p133 = scmp.ne.s32.totalorder %s121, %s122
      %p134 = scmp.eq.s32.totalorder %s26, 1
      %p135 = por %p133, %p134
      %p137 = scmp.ne.s32.totalorder %s122, %s136
      %p138 = scmp.eq.s32.totalorder %s26, 0
      %p139 = por %p137, %p138
      %s140 = ssub.s32 %s27, %s39
      %s141 = ssub.s32 %s28, %s35
      %s142 = sor.u32 %s140, %s141
      %p143 = scmp.eq.s32.totalorder %s142, 0
      %s145 = sadd.s32 %s144, 1
      %s146 = scalar_select %p143, %s144, %s145
      %p149 = pneg %p143
      %p150 = scmp.eq.s32.totalorder %s20, 1
      %p151 = por %p149, %p150
      %p152 = scmp.ne.s32.totalorder %s144, %s147
      %p153 = scmp.eq.s32.totalorder %s20, 0
      %p154 = por %p152, %p153
      %p155 = scmp.ne.s32.totalorder %s144, %s147
      %p156 = scmp.eq.s32.totalorder %s25, 1
      %p157 = por %p155, %p156
      %p158 = scmp.ne.s32.totalorder %s147, %s148
      %p159 = scmp.eq.s32.totalorder %s25, 0
      %p160 = por %p158, %p159
      %p161 = scmp.ne.s32.totalorder %s147, %s148
      %p162 = scmp.eq.s32.totalorder %s26, 1
      %p163 = por %p161, %p162
      %p165 = scmp.ne.s32.totalorder %s148, %s164
      %p166 = scmp.eq.s32.totalorder %s26, 0
      %p167 = por %p165, %p166
      %p168 = scmp.le.s32.totalorder 1, %s20
      %p169 = scmp.lt.s32.totalorder %s20, 3
      %p170 = pnand %p168, %p169
      %p171 = pneg %p170
      // Predicated region
      $region9: #{generator_block_apply.2} parent=5 // pred_check
        _
      $region10: #{generator_block_apply.2} parent=5 // pred_check_branch
        %173 = sbr.rel (%p170) target = $region12
      $region11: #{generator_block_apply.2} parent=5 // pred_region
        %s174 = ssub.s32 %s20, 1
        // Predicated region
        $region13: #{generator_block_apply.2} parent=11 // pred_check
          %p175 = pneg %p111
        $region14: #{generator_block_apply.2} parent=11 // pred_check_branch
          %177 = sbr.rel (%p175) target = $region16
        $region15: #{generator_block_apply.2} parent=11 // pred_region
          %s179 = ssub.s32 64, 64
          %180 = vsyncadd [#allocation6], %s179
          %s182 = sshll.u32 [#allocation7], 4
          %s183 = int_to_ptr.vmem [resolvable:$true] %s182
          %185 = dma.hbm_to_vmem [thread:$0]  %s2, 64, %s183, [#allocation6]
        $region16: #{generator_block_apply.2} parent=11 // pred_fallthru
          _
        // Predicated region
        $region17: #{generator_block_apply.2} parent=11 // pred_check
          %p186 = pneg %p132
        $region18: #{generator_block_apply.2} parent=11 // pred_check_branch
          %188 = sbr.rel (%p186) target = $region20
        $region19: #{generator_block_apply.2} parent=11 // pred_region
          %s190 = ssub.s32 128, 128
          %191 = vsyncadd [#allocation9], %s190
          %s193 = sshll.u32 [#allocation8], 4
          %s194 = int_to_ptr.vmem [resolvable:$true] %s193
          %196 = dma.hbm_to_vmem [thread:$0]  %s3, 128, %s194, [#allocation9]
        $region20: #{generator_block_apply.2} parent=11 // pred_fallthru
          _
      $region12: #{generator_block_apply.2} parent=5 // pred_fallthru
        _
      %p197 = scmp.lt.s32.totalorder %s20, 2
      // Predicated region
      $region21: #{generator_block_apply.2} parent=5 // pred_check
        %p198 = pneg %p197
      $region22: #{generator_block_apply.2} parent=5 // pred_check_branch
        %200 = sbr.rel (%p198) target = $region24
      $region23: #{generator_block_apply.2} parent=5 // pred_region
        // Predicated region
        $region25: #{generator_block_apply.2} parent=23 // pred_check
          %p201 = pneg %p54
        $region26: #{generator_block_apply.2} parent=23 // pred_check_branch
          %203 = sbr.rel (%p201) target = $region28
        $region27: #{generator_block_apply.2} parent=23 // pred_region
          %s204 = sand.u32 %s44, 1
          %s205 = scalar_lea.sflag [#allocation3], %s204
          %s206 = sand.u32 %s44, 1
          %s207 = smul.addr %s206, 4
          %s208 = scalar_lea.vmem [#allocation2], %s207
          %s210 = ssub.s32 64, 64
          %211 = vsyncadd %s205, %s210
          %s212 = smul.addr %s27, 2
          %s213 = sadd.s32 %s28, %s212
          %s214 = smul.addr %s213, 64
          %s215 = scalar_lea.hbm %s0, %s214
          %s217 = sshll.u32 %s208, 4
          %s218 = int_to_ptr.vmem [resolvable:$true] %s217
          %220 = dma.hbm_to_vmem [thread:$0]  %s215, 64, %s218, %s205
        $region28: #{generator_block_apply.2} parent=23 // pred_fallthru
          _
        // Predicated region
        $region29: #{generator_block_apply.2} parent=23 // pred_check
          %p221 = pneg %p84
        $region30: #{generator_block_apply.2} parent=23 // pred_check_branch
          %223 = sbr.rel (%p221) target = $region32
        $region31: #{generator_block_apply.2} parent=23 // pred_region
          %s224 = sand.u32 %s20, 1
          %s225 = scalar_lea.sflag [#allocation6], %s224
          %s226 = sand.u32 %s74, 1
          %s227 = smul.addr %s226, 4
          %s228 = scalar_lea.vmem [#allocation5], %s227
          %s229 = sadd.s32 %s28, 1
          %s231 = ssub.s32 64, 64
          %232 = vsyncadd %s225, %s231
          %s233 = smul.addr %s27, 2
          %s234 = sadd.s32 %s229, %s233
          %s235 = smul.addr %s234, 64
          %s236 = scalar_lea.hbm %s1, %s235
          %s238 = sshll.u32 %s228, 4
          %s239 = int_to_ptr.vmem [resolvable:$true] %s238
          %241 = dma.hbm_to_vmem [thread:$0]  %s236, 64, %s239, %s225
        $region32: #{generator_block_apply.2} parent=23 // pred_fallthru
          _
      $region24: #{generator_block_apply.2} parent=5 // pred_fallthru
        _
      %p242 = scmp.le.s32.totalorder 1, %s20
      %p243 = scmp.lt.s32.totalorder %s20, 3
      %p244 = pnand %p242, %p243
      %p245 = pneg %p244
      // Predicated region
      $region33: #{generator_block_apply.2} parent=5 // pred_check
        _
      $region34: #{generator_block_apply.2} parent=5 // pred_check_branch
        %247 = sbr.rel (%p244) target = $region36
      $region35: #{generator_block_apply.2} parent=5 // pred_region
        %s248 = ssub.s32 %s20, 1
        %s249 = sand.u32 %s47, 1
        %s250 = scalar_lea.sflag [#allocation3], %s249
        %s251 = sand.u32 %s47, 1
        %s252 = smul.addr %s251, 4
        %s253 = scalar_lea.vmem [#allocation2], %s252
        // Predicated region
        $region37: #{generator_block_apply.2} parent=35 // pred_check
          %p254 = pneg %p60
        $region38: #{generator_block_apply.2} parent=35 // pred_check_branch
          %256 = sbr.rel (%p254) target = $region40
        $region39: #{generator_block_apply.2} parent=35 // pred_region
          %257 = dma.done %s250, 64
        $region40: #{generator_block_apply.2} parent=35 // pred_fallthru
          _
        %s258 = sand.u32 %s25, 1
        %s259 = scalar_lea.sflag [#allocation6], %s258
        %s260 = sand.u32 %s77, 1
        %s261 = smul.addr %s260, 4
        %s262 = scalar_lea.vmem [#allocation5], %s261
        // Predicated region
        $region41: #{generator_block_apply.2} parent=35 // pred_check
          %p263 = pneg %p90
        $region42: #{generator_block_apply.2} parent=35 // pred_check_branch
          %265 = sbr.rel (%p263) target = $region44
        $region43: #{generator_block_apply.2} parent=35 // pred_region
          %266 = dma.done %s259, 64
        $region44: #{generator_block_apply.2} parent=35 // pred_fallthru
          _
        // Predicated region
        $region45: #{generator_block_apply.2} parent=35 // pred_check
          %p267 = pneg %p111
        $region46: #{generator_block_apply.2} parent=35 // pred_check_branch
          %269 = sbr.rel (%p267) target = $region48
        $region47: #{generator_block_apply.2} parent=35 // pred_region
          %270 = dma.done [#allocation6], 64
        $region48: #{generator_block_apply.2} parent=35 // pred_fallthru
          _
        // Predicated region
        $region49: #{generator_block_apply.2} parent=35 // pred_check
          %p271 = pneg %p132
        $region50: #{generator_block_apply.2} parent=35 // pred_check_branch
          %273 = sbr.rel (%p271) target = $region52
        $region51: #{generator_block_apply.2} parent=35 // pred_region
          %274 = dma.done [#allocation9], 128
        $region52: #{generator_block_apply.2} parent=35 // pred_fallthru
          _
        %s275 = sand.u32 %s47, 1
        %s276 = scalar_lea.sflag [#allocation3], %s275
        %s277 = sand.u32 %s47, 1
        %s278 = smul.addr %s277, 4
        %s279 = scalar_lea.vmem [#allocation2], %s278
        %p280 = pneg %p60
        %p281 = pneg %p57
        %s282 = sand.u32 %s25, 1
        %s283 = scalar_lea.sflag [#allocation6], %s282
        %s284 = sand.u32 %s77, 1
        %s285 = smul.addr %s284, 4
        %s286 = scalar_lea.vmem [#allocation5], %s285
        %p287 = pneg %p90
        %p288 = pneg %p87
        %p289 = pneg %p111
        %p290 = pneg %p108
        %p291 = pneg %p132
        %p292 = pneg %p129
        %p293 = pneg %p160
        %p294 = pneg %p157
        %s295 = sand.u32 %s147, 1
        %s296 = scalar_lea.sflag [#allocation4], %s295
        %s297 = sand.u32 %s147, 1
        %s298 = smul.addr %s297, 4
        %s299 = scalar_lea.vmem [#allocation10], %s298
        %s300 = sadd.s32 %s30, 1
        %v302 = vld [vmem:[%s253] sm:$0xf]
        %v303 = vld [vmem:[%s262] sm:$0xf]
        %v304 = vunpack.c.l.bf16 %v302
        %v305 = vunpack.c.l.bf16 %v303
        %vm306 = vcmp.gt.f32.partialorder %v304, 0.0
        %vm307 = vcmp.gt.f32.partialorder %v305, 0.0
        %v308 = vmul.f32 %v304, 0.01
        %v309 = vmul.f32 %v305, 0.01
        %v310 = vsel %vm306, %v304, %v308
        %v311 = vsel %vm307, %v305, %v309
        %v312 = vpack.c.bf16 %v310, %v310
        %v313 = vpack.c.bf16 %v311, %v311
        %v316 = vrot.slane %v312, 4
        %v317 = vrot.slane %v313, 4
        %318 = vrot.lane.b32.xlu0 %v316, 127
        %v319 = vpop.permute.xlu0 %318
        %320 = vrot.lane.b32.xlu0 %v317, 127
        %v321 = vpop.permute.xlu0 %320
        %vm322 = vcmask 1039360
        %v323 = vsel %vm322, %v319, %v321
        %vm324 = vcmask 1043456
        %v327 = vsel %vm324, %v312, %v323
        %v329 = vld [vmem:[#allocation7] sm:$0xf]
        %v330 = vld [vmem:[#allocation8] sm:$0xff]
        %332 = vset.pattern.permute.xlu0 0
        %333 = vperm.xlu0 %332, %v330
        %v334 = vpop.permute.xlu0 %333
        %vm336 = vcmask 130048
        %v338 = vsel %vm336, %v329, 0
        %340 = vmatprep.subr.bf16.mxu0 0
        %341 = vmatpush1.bf16.msra.mxu0 %v327
        %342 = vmatprep.subr.bf16.mxu0 0
        %343 = vmatpush1.bf16.msra.mxu0 0
        %344 = vmatprep.subr.bf16.mxu0 0
        %345 = vmatpush1.bf16.msra.mxu0 0
        %346 = vmatprep.subr.bf16.mxu0 0
        %347 = vmatpush1.bf16.msra.mxu0 0
        %348 = vmatprep.subr.bf16.mxu0 0
        %349 = vmatpush1.bf16.msra.mxu0 0
        %350 = vmatprep.subr.bf16.mxu0 0
        %351 = vmatpush1.bf16.msra.mxu0 0
        %352 = vmatprep.subr.bf16.mxu0 0
        %353 = vmatpush1.bf16.msra.mxu0 0
        %354 = vmatprep.subr.bf16.mxu0 0
        %355 = vmatpush1.bf16.msra.mxu0 0
        %356 = vmatprep.subr.bf16.mxu0 0
        %357 = vmatpush1.bf16.msra.mxu0 0
        %358 = vmatprep.subr.bf16.mxu0 0
        %359 = vmatpush1.bf16.msra.mxu0 0
        %360 = vmatprep.subr.bf16.mxu0 0
        %361 = vmatpush1.bf16.msra.mxu0 0
        %362 = vmatprep.subr.bf16.mxu0 0
        %363 = vmatpush1.bf16.msra.mxu0 0
        %364 = vmatprep.subr.bf16.mxu0 0
        %365 = vmatpush1.bf16.msra.mxu0 0
        %366 = vmatprep.subr.bf16.mxu0 0
        %367 = vmatpush1.bf16.msra.mxu0 0
        %368 = vmatprep.subr.bf16.mxu0 0
        %369 = vmatpush1.bf16.msra.mxu0 0
        %370 = vmatprep.subr.bf16.mxu0 0
        %371 = vmatpush1.bf16.msra.mxu0 0
        %372 = vmatprep.mubr.bf16.mxu0 0
        %373 = vmatmul.mubr.bf16.gmra.mrb[0].mxu0 %v338
        %v374 = vpop.f32.mrb[0].mxu0
        %v375 = vadd.f32 %v334, %v374
        %v376 = vpop.f32.mrb[0].mxu0
        %v377 = vpop.f32.mrb[0].mxu0
        %v378 = vpop.f32.mrb[0].mxu0
        %379 = vdwg.mxu0
        %v380 = vpack.c.bf16 %v375, %v375
        %381 = vst [vmem:[%s299] sm:$0xf] %v380
        %s382 = sand.u32 %s147, 1
        %s383 = scalar_lea.sflag [#allocation4], %s382
        %s384 = sand.u32 %s147, 1
        %s385 = smul.addr %s384, 4
        %s386 = scalar_lea.vmem [#allocation10], %s385
        // Predicated region
        $region53: #{generator_block_apply.2} parent=35 // pred_check
          %p387 = pneg %p157
        $region54: #{generator_block_apply.2} parent=35 // pred_check_branch
          %389 = sbr.rel (%p387) target = $region56
        $region55: #{generator_block_apply.2} parent=35 // pred_region
          %s391 = ssub.s32 64, 64
          %392 = vsyncadd %s383, %s391
          %s393 = sadd.s32 %s30, %s29
          %s394 = smul.addr %s393, 64
          %s395 = scalar_lea.hbm %s4, %s394
          %s397 = sshll.u32 %s386, 4
          %s398 = int_to_ptr.vmem [resolvable:$true] %s397
          %400 = dma.vmem_to_hbm [thread:$0]  %s398, 64, %s395, %s383
        $region56: #{generator_block_apply.2} parent=35 // pred_fallthru
          _
      $region36: #{generator_block_apply.2} parent=5 // pred_fallthru
        _
      %p401 = scmp.le.s32.totalorder 2, %s20
      // Predicated region
      $region57: #{generator_block_apply.2} parent=5 // pred_check
        %p402 = pneg %p401
      $region58: #{generator_block_apply.2} parent=5 // pred_check_branch
        %404 = sbr.rel (%p402) target = $region60
      $region59: #{generator_block_apply.2} parent=5 // pred_region
        %s405 = ssub.s32 %s20, 2
        // Predicated region
        $region61: #{generator_block_apply.2} parent=59 // pred_check
          %p406 = pneg %p163
        $region62: #{generator_block_apply.2} parent=59 // pred_check_branch
          %408 = sbr.rel (%p406) target = $region64
        $region63: #{generator_block_apply.2} parent=59 // pred_region
          %s409 = sand.u32 %s148, 1
          %s410 = scalar_lea.sflag [#allocation4], %s409
          %s411 = sand.u32 %s148, 1
          %s412 = smul.addr %s411, 4
          %s413 = scalar_lea.vmem [#allocation10], %s412
          %414 = dma.done %s410, 64
        $region64: #{generator_block_apply.2} parent=59 // pred_fallthru
          _
      $region60: #{generator_block_apply.2} parent=5 // pred_fallthru
        _
    $region6: #{generator_block_apply.2} parent=1 // loop_footer
      %s24 = sadd.s32 1, %s20
    $region7: #{generator_block_apply.2} parent=1 // loop_footer_branch
      %19 = sbr.rel target = $region3
    $region8: #{generator_block_apply.2} parent=1 // loop_exit
      _
    %415 = vsyncpa [#allocation3], 1
    %s416 = scalar_lea.sflag [#allocation3], 1
    %417 = vsyncpa %s416, 1
    %418 = vsyncpa [#allocation6], 1
    %s419 = scalar_lea.sflag [#allocation6], 1
    %420 = vsyncpa %s419, 1
    %421 = vsyncpa [#allocation9], 1
    %422 = vsyncpa [#allocation4], 1
    %s423 = scalar_lea.sflag [#allocation4], 1
    %424 = vsyncpa %s423, 1

// kernel: generator_block_apply.3
$region0: #{generator_block_apply.3}
  #allocation0 [shape = 'u32[]', space=smem, size = 0x4, offset = 0x4, fixed_abs, tag = 'smem constant byte address 0x4 - core index']
  #allocation1 [shape = 'u32[144,128]{1,0:T(1,128)}', space=vmem, size = 0x12000, scoped, tag = 'internal scratch']
  %s0 = inlined_call_operand.hbm [shape: bf16[2,4,256], index: 0, kind: input, shape index: {}, may-alias: {0,1}]
  %s1 = inlined_call_operand.hbm [shape: bf16[2,4,256], index: 1, kind: input, shape index: {}, may-alias: {0,1}]
  %s2 = inlined_call_operand.hbm [shape: bf16[4,12], index: 2, kind: input, shape index: {}]
  %s3 = inlined_call_operand.hbm [shape: f32[4,1], index: 3, kind: input, shape index: {}]
  %s4 = inlined_call_operand.hbm [shape: bf16[4,12], index: 4, kind: input, shape index: {}]
  %s5 = inlined_call_operand.hbm [shape: f32[4,1], index: 5, kind: input, shape index: {}]
  %s6 = inlined_call_operand.hbm [shape: bf16[4,12], index: 6, kind: input, shape index: {}]
  %s7 = inlined_call_operand.hbm [shape: f32[4,1], index: 7, kind: input, shape index: {}]
  %s8 = inlined_call_operand.hbm [shape: bf16[4,12], index: 8, kind: input, shape index: {}]
  %s9 = inlined_call_operand.hbm [shape: f32[4,1], index: 9, kind: input, shape index: {}]
  %s10 = inlined_call_operand.hbm [shape: bf16[4,20], index: 10, kind: input, shape index: {}]
  %s11 = inlined_call_operand.hbm [shape: f32[4,1], index: 11, kind: input, shape index: {}]
  %s12 = inlined_call_operand.hbm [shape: bf16[4,20], index: 12, kind: input, shape index: {}]
  %s13 = inlined_call_operand.hbm [shape: f32[4,1], index: 13, kind: input, shape index: {}]
  %s14 = inlined_call_operand.hbm [shape: f32[2,4,128], index: 14, kind: output, shape index: {}]
  %s15 = sld [smem:[#allocation0]]
  $region145: #{generator_block_apply.3} parent=0
    _
  %s17 = ssub.s32 1, %s15
  %s18 = scalar_select 0, %s17, %s15
  $region1: #{generator_block_apply.3} parent=0
    #allocation2 [shape = 'u8[2048]{0}', space=vmem, size = 0x800, scoped, tag = 'input window, operand 0']
    #allocation3 [shape = 's32[2]{0}', space=sflag, size = 0x8, scoped, tag = 'scoped memory for generator_block_apply.3']
    #allocation4 [shape = 's32[2]{0}', space=sflag, size = 0x8, scoped, tag = 'scoped memory for generator_block_apply.3']
    #allocation5 [shape = 'u8[2048]{0}', space=vmem, size = 0x800, scoped, tag = 'input window, operand 1']
    #allocation6 [shape = 's32[2]{0}', space=sflag, size = 0x8, scoped, tag = 'scoped memory for generator_block_apply.3']
    #allocation7 [shape = 'u8[1024]{0}', space=vmem, size = 0x400, scoped, tag = 'input window, operand 2, single buffered']
    #allocation8 [shape = 'u8[2048]{0}', space=vmem, size = 0x800, scoped, tag = 'input window, operand 3, single buffered']
    #allocation9 [shape = 's32[1]{0}', space=sflag, size = 0x4, scoped, tag = 'scoped memory for generator_block_apply.3']
    #allocation10 [shape = 'u8[1024]{0}', space=vmem, size = 0x400, scoped, tag = 'input window, operand 4, single buffered']
    #allocation11 [shape = 'u8[2048]{0}', space=vmem, size = 0x800, scoped, tag = 'input window, operand 5, single buffered']
    #allocation12 [shape = 's32[1]{0}', space=sflag, size = 0x4, scoped, tag = 'scoped memory for generator_block_apply.3']
    #allocation13 [shape = 'u8[1024]{0}', space=vmem, size = 0x400, scoped, tag = 'input window, operand 6, single buffered']
    #allocation14 [shape = 'u8[2048]{0}', space=vmem, size = 0x800, scoped, tag = 'input window, operand 7, single buffered']
    #allocation15 [shape = 's32[1]{0}', space=sflag, size = 0x4, scoped, tag = 'scoped memory for generator_block_apply.3']
    #allocation16 [shape = 'u8[1024]{0}', space=vmem, size = 0x400, scoped, tag = 'input window, operand 8, single buffered']
    #allocation17 [shape = 'u8[2048]{0}', space=vmem, size = 0x800, scoped, tag = 'input window, operand 9, single buffered']
    #allocation18 [shape = 's32[1]{0}', space=sflag, size = 0x4, scoped, tag = 'scoped memory for generator_block_apply.3']
    #allocation19 [shape = 'u8[1024]{0}', space=vmem, size = 0x400, scoped, tag = 'input window, operand 10, single buffered']
    #allocation20 [shape = 'u8[2048]{0}', space=vmem, size = 0x800, scoped, tag = 'input window, operand 11, single buffered']
    #allocation21 [shape = 's32[1]{0}', space=sflag, size = 0x4, scoped, tag = 'scoped memory for generator_block_apply.3']
    #allocation22 [shape = 'u8[1024]{0}', space=vmem, size = 0x400, scoped, tag = 'input window, operand 12, single buffered']
    #allocation23 [shape = 'u8[2048]{0}', space=vmem, size = 0x800, scoped, tag = 'input window, operand 13, single buffered']
    #allocation24 [shape = 's32[1]{0}', space=sflag, size = 0x4, scoped, tag = 'scoped memory for generator_block_apply.3']
    #allocation25 [shape = 'u8[4096]{0}', space=vmem, size = 0x1000, scoped, tag = 'output window, operand 0']
    %19 = vsyncpa [#allocation3], 0
    %s20 = scalar_lea.sflag [#allocation3], 1
    %21 = vsyncpa %s20, 0
    %22 = vsyncpa [#allocation6], 0
    %s23 = scalar_lea.sflag [#allocation6], 1
    %24 = vsyncpa %s23, 0
    %25 = vsyncpa [#allocation9], 0
    %26 = vsyncpa [#allocation12], 0
    %27 = vsyncpa [#allocation15], 0
    %28 = vsyncpa [#allocation18], 0
    %29 = vsyncpa [#allocation21], 0
    %30 = vsyncpa [#allocation24], 0
    %31 = vsyncpa [#allocation4], 0
    %s32 = scalar_lea.sflag [#allocation4], 1
    %33 = vsyncpa %s32, 0
    loop: start=0, step=1, limit=4
    $region2: #{generator_block_apply.3} parent=1 // loop_pre_header
      _
    $region3: #{generator_block_apply.3} parent=1 // loop_header
      %s35 = sphi 0, %s39
      %p36 = scmp.ge.s32.totalorder %s35, 4
      %s42 = sphi 0, %s54
      %s43 = sphi 0, %s50
      %s44 = sphi 0, %s42
      %s45 = sphi 0, %s43
      %s46 = sphi 0, %s44
      %s47 = sphi 0, %s45
      %s59 = sphi 0, %s61
      %s62 = sphi 0, %s59
      %s63 = sphi 0, %s62
      %s79 = sphi 0, %s63
      %s89 = sphi 0, %s91
      %s92 = sphi 0, %s89
      %s93 = sphi 0, %s92
      %s109 = sphi 0, %s93
      %s113 = sphi 0, %s113
      %s115 = sphi 0, %s113
      %s116 = sphi 0, %s115
      %s130 = sphi 0, %s116
      %s134 = sphi 0, %s134
      %s136 = sphi 0, %s134
      %s137 = sphi 0, %s136
      %s151 = sphi 0, %s137
      %s155 = sphi 0, %s155
      %s157 = sphi 0, %s155
      %s158 = sphi 0, %s157
      %s172 = sphi 0, %s158
      %s176 = sphi 0, %s176
      %s178 = sphi 0, %s176
      %s179 = sphi 0, %s178
      %s193 = sphi 0, %s179
      %s197 = sphi 0, %s197
      %s199 = sphi 0, %s197
      %s200 = sphi 0, %s199
      %s214 = sphi 0, %s200
      %s218 = sphi 0, %s218
      %s220 = sphi 0, %s218
      %s221 = sphi 0, %s220
      %s235 = sphi 0, %s221
      %s239 = sphi 0, %s239
      %s241 = sphi 0, %s239
      %s242 = sphi 0, %s241
      %s256 = sphi 0, %s242
      %s260 = sphi 0, %s260
      %s262 = sphi 0, %s260
      %s263 = sphi 0, %s262
      %s277 = sphi 0, %s263
      %s281 = sphi 0, %s281
      %s283 = sphi 0, %s281
      %s284 = sphi 0, %s283
      %s298 = sphi 0, %s284
      %s302 = sphi 0, %s302
      %s304 = sphi 0, %s302
      %s305 = sphi 0, %s304
      %s319 = sphi 0, %s305
      %s323 = sphi 0, %s323
      %s325 = sphi 0, %s323
      %s326 = sphi 0, %s325
      %s340 = sphi 0, %s326
      %s344 = sphi 0, %s344
      %s346 = sphi 0, %s344
      %s347 = sphi 0, %s346
      %s361 = sphi 0, %s347
      %s369 = sphi 0, %s371
      %s372 = sphi 0, %s369
      %s373 = sphi 0, %s372
      %s389 = sphi 0, %s373
    $region4: #{generator_block_apply.3} parent=1 // loop_header_branch
      %38 = sbr.rel (%p36) target = $region8
    $region5: #{generator_block_apply.3} parent=1 // loop_body
      %s40 = ssub.s32 %s35, 1
      %s41 = ssub.s32 %s35, 2
      %s48 = sadd.s32 1, %s43
      %p49 = scmp.ge.s32.totalorder %s48, 1
      %s50 = scalar_select %p49, 0, %s48
      %s51 = sadd.s32 1, %s42
      %s52 = scalar_select %p49, %s51, %s42
      %p53 = scmp.ge.s32.totalorder %s52, 2
      %s54 = scalar_select %p53, 0, %s52
      %s55 = ssub.s32 %s42, %s54
      %s56 = ssub.s32 %s43, %s50
      %s57 = sor.u32 %s55, %s56
      %p58 = scmp.eq.s32.totalorder %s57, 0
      %s60 = sadd.s32 %s59, 1
      %s61 = scalar_select %p58, %s59, %s60
      %p64 = pneg %p58
      %p65 = scmp.eq.s32.totalorder %s35, 1
      %p66 = por %p64, %p65
      %p67 = scmp.ne.s32.totalorder %s59, %s62
      %p68 = scmp.eq.s32.totalorder %s35, 0
      %p69 = por %p67, %p68
      %p70 = scmp.ne.s32.totalorder %s59, %s62
      %p71 = scmp.eq.s32.totalorder %s40, 1
      %p72 = por %p70, %p71
      %p73 = scmp.ne.s32.totalorder %s62, %s63
      %p74 = scmp.eq.s32.totalorder %s40, 0
      %p75 = por %p73, %p74
      %p76 = scmp.ne.s32.totalorder %s62, %s63
      %p77 = scmp.eq.s32.totalorder %s41, 1
      %p78 = por %p76, %p77
      %p80 = scmp.ne.s32.totalorder %s63, %s79
      %p81 = scmp.eq.s32.totalorder %s41, 0
      %p82 = por %p80, %p81
      %s83 = sadd.s32 %s43, 1
      %s84 = sadd.s32 %s50, 1
      %s85 = ssub.s32 %s42, %s54
      %s86 = ssub.s32 %s83, %s84
      %s87 = sor.u32 %s85, %s86
      %p88 = scmp.eq.s32.totalorder %s87, 0
      %s90 = sadd.s32 %s89, 1
      %s91 = scalar_select %p88, %s89, %s90
      %p94 = pneg %p88
      %p95 = scmp.eq.s32.totalorder %s35, 1
      %p96 = por %p94, %p95
      %p97 = scmp.ne.s32.totalorder %s89, %s92
      %p98 = scmp.eq.s32.totalorder %s35, 0
      %p99 = por %p97, %p98
      %p100 = scmp.ne.s32.totalorder %s89, %s92
      %p101 = scmp.eq.s32.totalorder %s40, 1
      %p102 = por %p100, %p101
      %p103 = scmp.ne.s32.totalorder %s92, %s93
      %p104 = scmp.eq.s32.totalorder %s40, 0
      %p105 = por %p103, %p104
      %p106 = scmp.ne.s32.totalorder %s92, %s93
      %p107 = scmp.eq.s32.totalorder %s41, 1
      %p108 = por %p106, %p107
      %p110 = scmp.ne.s32.totalorder %s93, %s109
      %p111 = scmp.eq.s32.totalorder %s41, 0
      %p112 = por %p110, %p111
      %s114 = sadd.s32 %s113, 1
      %p117 = scmp.eq.s32.totalorder %s35, 1
      %p118 = scmp.ne.s32.totalorder %s113, %s115
      %p119 = scmp.eq.s32.totalorder %s35, 0
      %p120 = por %p118, %p119
      %p121 = scmp.ne.s32.totalorder %s113, %s115
      %p122 = scmp.eq.s32.totalorder %s40, 1
      %p123 = por %p121, %p122
      %p124 = scmp.ne.s32.totalorder %s115, %s116
      %p125 = scmp.eq.s32.totalorder %s40, 0
      %p126 = por %p124, %p125
      %p127 = scmp.ne.s32.totalorder %s115, %s116
      %p128 = scmp.eq.s32.totalorder %s41, 1
      %p129 = por %p127, %p128
      %p131 = scmp.ne.s32.totalorder %s116, %s130
      %p132 = scmp.eq.s32.totalorder %s41, 0
      %p133 = por %p131, %p132
      %s135 = sadd.s32 %s134, 1
      %p138 = scmp.eq.s32.totalorder %s35, 1
      %p139 = scmp.ne.s32.totalorder %s134, %s136
      %p140 = scmp.eq.s32.totalorder %s35, 0
      %p141 = por %p139, %p140
      %p142 = scmp.ne.s32.totalorder %s134, %s136
      %p143 = scmp.eq.s32.totalorder %s40, 1
      %p144 = por %p142, %p143
      %p145 = scmp.ne.s32.totalorder %s136, %s137
      %p146 = scmp.eq.s32.totalorder %s40, 0
      %p147 = por %p145, %p146
      %p148 = scmp.ne.s32.totalorder %s136, %s137
      %p149 = scmp.eq.s32.totalorder %s41, 1
      %p150 = por %p148, %p149
      %p152 = scmp.ne.s32.totalorder %s137, %s151
      %p153 = scmp.eq.s32.totalorder %s41, 0
      %p154 = por %p152, %p153
      %s156 = sadd.s32 %s155, 1
      %p159 = scmp.eq.s32.totalorder %s35, 1
      %p160 = scmp.ne.s32.totalorder %s155, %s157
      %p161 = scmp.eq.s32.totalorder %s35, 0
      %p162 = por %p160, %p161
      %p163 = scmp.ne.s32.totalorder %s155, %s157
      %p164 = scmp.eq.s32.totalorder %s40, 1
      %p165 = por %p163, %p164
      %p166 = scmp.ne.s32.totalorder %s157, %s158
      %p167 = scmp.eq.s32.totalorder %s40, 0
      %p168 = por %p166, %p167
      %p169 = scmp.ne.s32.totalorder %s157, %s158
      %p170 = scmp.eq.s32.totalorder %s41, 1
      %p171 = por %p169, %p170
      %p173 = scmp.ne.s32.totalorder %s158, %s172
      %p174 = scmp.eq.s32.totalorder %s41, 0
      %p175 = por %p173, %p174
      %s177 = sadd.s32 %s176, 1
      %p180 = scmp.eq.s32.totalorder %s35, 1
      %p181 = scmp.ne.s32.totalorder %s176, %s178
      %p182 = scmp.eq.s32.totalorder %s35, 0
      %p183 = por %p181, %p182
      %p184 = scmp.ne.s32.totalorder %s176, %s178
      %p185 = scmp.eq.s32.totalorder %s40, 1
      %p186 = por %p184, %p185
      %p187 = scmp.ne.s32.totalorder %s178, %s179
      %p188 = scmp.eq.s32.totalorder %s40, 0
      %p189 = por %p187, %p188
      %p190 = scmp.ne.s32.totalorder %s178, %s179
      %p191 = scmp.eq.s32.totalorder %s41, 1
      %p192 = por %p190, %p191
      %p194 = scmp.ne.s32.totalorder %s179, %s193
      %p195 = scmp.eq.s32.totalorder %s41, 0
      %p196 = por %p194, %p195
      %s198 = sadd.s32 %s197, 1
      %p201 = scmp.eq.s32.totalorder %s35, 1
      %p202 = scmp.ne.s32.totalorder %s197, %s199
      %p203 = scmp.eq.s32.totalorder %s35, 0
      %p204 = por %p202, %p203
      %p205 = scmp.ne.s32.totalorder %s197, %s199
      %p206 = scmp.eq.s32.totalorder %s40, 1
      %p207 = por %p205, %p206
      %p208 = scmp.ne.s32.totalorder %s199, %s200
      %p209 = scmp.eq.s32.totalorder %s40, 0
      %p210 = por %p208, %p209
      %p211 = scmp.ne.s32.totalorder %s199, %s200
      %p212 = scmp.eq.s32.totalorder %s41, 1
      %p213 = por %p211, %p212
      %p215 = scmp.ne.s32.totalorder %s200, %s214
      %p216 = scmp.eq.s32.totalorder %s41, 0
      %p217 = por %p215, %p216
      %s219 = sadd.s32 %s218, 1
      %p222 = scmp.eq.s32.totalorder %s35, 1
      %p223 = scmp.ne.s32.totalorder %s218, %s220
      %p224 = scmp.eq.s32.totalorder %s35, 0
      %p225 = por %p223, %p224
      %p226 = scmp.ne.s32.totalorder %s218, %s220
      %p227 = scmp.eq.s32.totalorder %s40, 1
      %p228 = por %p226, %p227
      %p229 = scmp.ne.s32.totalorder %s220, %s221
      %p230 = scmp.eq.s32.totalorder %s40, 0
      %p231 = por %p229, %p230
      %p232 = scmp.ne.s32.totalorder %s220, %s221
      %p233 = scmp.eq.s32.totalorder %s41, 1
      %p234 = por %p232, %p233
      %p236 = scmp.ne.s32.totalorder %s221, %s235
      %p237 = scmp.eq.s32.totalorder %s41, 0
      %p238 = por %p236, %p237
      %s240 = sadd.s32 %s239, 1
      %p243 = scmp.eq.s32.totalorder %s35, 1
      %p244 = scmp.ne.s32.totalorder %s239, %s241
      %p245 = scmp.eq.s32.totalorder %s35, 0
      %p246 = por %p244, %p245
      %p247 = scmp.ne.s32.totalorder %s239, %s241
      %p248 = scmp.eq.s32.totalorder %s40, 1
      %p249 = por %p247, %p248
      %p250 = scmp.ne.s32.totalorder %s241, %s242
      %p251 = scmp.eq.s32.totalorder %s40, 0
      %p252 = por %p250, %p251
      %p253 = scmp.ne.s32.totalorder %s241, %s242
      %p254 = scmp.eq.s32.totalorder %s41, 1
      %p255 = por %p253, %p254
      %p257 = scmp.ne.s32.totalorder %s242, %s256
      %p258 = scmp.eq.s32.totalorder %s41, 0
      %p259 = por %p257, %p258
      %s261 = sadd.s32 %s260, 1
      %p264 = scmp.eq.s32.totalorder %s35, 1
      %p265 = scmp.ne.s32.totalorder %s260, %s262
      %p266 = scmp.eq.s32.totalorder %s35, 0
      %p267 = por %p265, %p266
      %p268 = scmp.ne.s32.totalorder %s260, %s262
      %p269 = scmp.eq.s32.totalorder %s40, 1
      %p270 = por %p268, %p269
      %p271 = scmp.ne.s32.totalorder %s262, %s263
      %p272 = scmp.eq.s32.totalorder %s40, 0
      %p273 = por %p271, %p272
      %p274 = scmp.ne.s32.totalorder %s262, %s263
      %p275 = scmp.eq.s32.totalorder %s41, 1
      %p276 = por %p274, %p275
      %p278 = scmp.ne.s32.totalorder %s263, %s277
      %p279 = scmp.eq.s32.totalorder %s41, 0
      %p280 = por %p278, %p279
      %s282 = sadd.s32 %s281, 1
      %p285 = scmp.eq.s32.totalorder %s35, 1
      %p286 = scmp.ne.s32.totalorder %s281, %s283
      %p287 = scmp.eq.s32.totalorder %s35, 0
      %p288 = por %p286, %p287
      %p289 = scmp.ne.s32.totalorder %s281, %s283
      %p290 = scmp.eq.s32.totalorder %s40, 1
      %p291 = por %p289, %p290
      %p292 = scmp.ne.s32.totalorder %s283, %s284
      %p293 = scmp.eq.s32.totalorder %s40, 0
      %p294 = por %p292, %p293
      %p295 = scmp.ne.s32.totalorder %s283, %s284
      %p296 = scmp.eq.s32.totalorder %s41, 1
      %p297 = por %p295, %p296
      %p299 = scmp.ne.s32.totalorder %s284, %s298
      %p300 = scmp.eq.s32.totalorder %s41, 0
      %p301 = por %p299, %p300
      %s303 = sadd.s32 %s302, 1
      %p306 = scmp.eq.s32.totalorder %s35, 1
      %p307 = scmp.ne.s32.totalorder %s302, %s304
      %p308 = scmp.eq.s32.totalorder %s35, 0
      %p309 = por %p307, %p308
      %p310 = scmp.ne.s32.totalorder %s302, %s304
      %p311 = scmp.eq.s32.totalorder %s40, 1
      %p312 = por %p310, %p311
      %p313 = scmp.ne.s32.totalorder %s304, %s305
      %p314 = scmp.eq.s32.totalorder %s40, 0
      %p315 = por %p313, %p314
      %p316 = scmp.ne.s32.totalorder %s304, %s305
      %p317 = scmp.eq.s32.totalorder %s41, 1
      %p318 = por %p316, %p317
      %p320 = scmp.ne.s32.totalorder %s305, %s319
      %p321 = scmp.eq.s32.totalorder %s41, 0
      %p322 = por %p320, %p321
      %s324 = sadd.s32 %s323, 1
      %p327 = scmp.eq.s32.totalorder %s35, 1
      %p328 = scmp.ne.s32.totalorder %s323, %s325
      %p329 = scmp.eq.s32.totalorder %s35, 0
      %p330 = por %p328, %p329
      %p331 = scmp.ne.s32.totalorder %s323, %s325
      %p332 = scmp.eq.s32.totalorder %s40, 1
      %p333 = por %p331, %p332
      %p334 = scmp.ne.s32.totalorder %s325, %s326
      %p335 = scmp.eq.s32.totalorder %s40, 0
      %p336 = por %p334, %p335
      %p337 = scmp.ne.s32.totalorder %s325, %s326
      %p338 = scmp.eq.s32.totalorder %s41, 1
      %p339 = por %p337, %p338
      %p341 = scmp.ne.s32.totalorder %s326, %s340
      %p342 = scmp.eq.s32.totalorder %s41, 0
      %p343 = por %p341, %p342
      %s345 = sadd.s32 %s344, 1
      %p348 = scmp.eq.s32.totalorder %s35, 1
      %p349 = scmp.ne.s32.totalorder %s344, %s346
      %p350 = scmp.eq.s32.totalorder %s35, 0
      %p351 = por %p349, %p350
      %p352 = scmp.ne.s32.totalorder %s344, %s346
      %p353 = scmp.eq.s32.totalorder %s40, 1
      %p354 = por %p352, %p353
      %p355 = scmp.ne.s32.totalorder %s346, %s347
      %p356 = scmp.eq.s32.totalorder %s40, 0
      %p357 = por %p355, %p356
      %p358 = scmp.ne.s32.totalorder %s346, %s347
      %p359 = scmp.eq.s32.totalorder %s41, 1
      %p360 = por %p358, %p359
      %p362 = scmp.ne.s32.totalorder %s347, %s361
      %p363 = scmp.eq.s32.totalorder %s41, 0
      %p364 = por %p362, %p363
      %s365 = ssub.s32 %s42, %s54
      %s366 = ssub.s32 %s43, %s50
      %s367 = sor.u32 %s365, %s366
      %p368 = scmp.eq.s32.totalorder %s367, 0
      %s370 = sadd.s32 %s369, 1
      %s371 = scalar_select %p368, %s369, %s370
      %p374 = pneg %p368
      %p375 = scmp.eq.s32.totalorder %s35, 1
      %p376 = por %p374, %p375
      %p377 = scmp.ne.s32.totalorder %s369, %s372
      %p378 = scmp.eq.s32.totalorder %s35, 0
      %p379 = por %p377, %p378
      %p380 = scmp.ne.s32.totalorder %s369, %s372
      %p381 = scmp.eq.s32.totalorder %s40, 1
      %p382 = por %p380, %p381
      %p383 = scmp.ne.s32.totalorder %s372, %s373
      %p384 = scmp.eq.s32.totalorder %s40, 0
      %p385 = por %p383, %p384
      %p386 = scmp.ne.s32.totalorder %s372, %s373
      %p387 = scmp.eq.s32.totalorder %s41, 1
      %p388 = por %p386, %p387
      %p390 = scmp.ne.s32.totalorder %s373, %s389
      %p391 = scmp.eq.s32.totalorder %s41, 0
      %p392 = por %p390, %p391
      %p393 = scmp.le.s32.totalorder 1, %s35
      %p394 = scmp.lt.s32.totalorder %s35, 3
      %p395 = pnand %p393, %p394
      %p396 = pneg %p395
      // Predicated region
      $region9: #{generator_block_apply.3} parent=5 // pred_check
        _
      $region10: #{generator_block_apply.3} parent=5 // pred_check_branch
        %398 = sbr.rel (%p395) target = $region12
      $region11: #{generator_block_apply.3} parent=5 // pred_region
        %s399 = ssub.s32 %s35, 1
        // Predicated region
        $region13: #{generator_block_apply.3} parent=11 // pred_check
          %p400 = pneg %p126
        $region14: #{generator_block_apply.3} parent=11 // pred_check_branch
          %402 = sbr.rel (%p400) target = $region16
        $region15: #{generator_block_apply.3} parent=11 // pred_region
          %s404 = ssub.s32 32, 32
          %405 = vsyncadd [#allocation6], %s404
          %s407 = sshll.u32 [#allocation7], 4
          %s408 = int_to_ptr.vmem [resolvable:$true] %s407
          %410 = dma.hbm_to_vmem [thread:$0]  %s2, 32, %s408, [#allocation6]
        $region16: #{generator_block_apply.3} parent=11 // pred_fallthru
          _
        // Predicated region
        $region17: #{generator_block_apply.3} parent=11 // pred_check
          %p411 = pneg %p147
        $region18: #{generator_block_apply.3} parent=11 // pred_check_branch
          %413 = sbr.rel (%p411) target = $region20
        $region19: #{generator_block_apply.3} parent=11 // pred_region
          %s415 = ssub.s32 64, 64
          %416 = vsyncadd [#allocation9], %s415
          %s418 = sshll.u32 [#allocation8], 4
          %s419 = int_to_ptr.vmem [resolvable:$true] %s418
          %421 = dma.hbm_to_vmem [thread:$0]  %s3, 64, %s419, [#allocation9]
        $region20: #{generator_block_apply.3} parent=11 // pred_fallthru
          _
        // Predicated region
        $region21: #{generator_block_apply.3} parent=11 // pred_check
          %p422 = pneg %p168
        $region22: #{generator_block_apply.3} parent=11 // pred_check_branch
          %424 = sbr.rel (%p422) target = $region24
        $region23: #{generator_block_apply.3} parent=11 // pred_region
          %s426 = ssub.s32 32, 32
          %427 = vsyncadd [#allocation9], %s426
          %s429 = sshll.u32 [#allocation10], 4
          %s430 = int_to_ptr.vmem [resolvable:$true] %s429
          %432 = dma.hbm_to_vmem [thread:$0]  %s4, 32, %s430, [#allocation9]
        $region24: #{generator_block_apply.3} parent=11 // pred_fallthru
          _
        // Predicated region
        $region25: #{generator_block_apply.3} parent=11 // pred_check
          %p433 = pneg %p189
        $region26: #{generator_block_apply.3} parent=11 // pred_check_branch
          %435 = sbr.rel (%p433) target = $region28
        $region27: #{generator_block_apply.3} parent=11 // pred_region
          %s437 = ssub.s32 64, 64
          %438 = vsyncadd [#allocation12], %s437
          %s440 = sshll.u32 [#allocation11], 4
          %s441 = int_to_ptr.vmem [resolvable:$true] %s440
          %443 = dma.hbm_to_vmem [thread:$0]  %s5, 64, %s441, [#allocation12]
        $region28: #{generator_block_apply.3} parent=11 // pred_fallthru
          _
        // Predicated region
        $region29: #{generator_block_apply.3} parent=11 // pred_check
          %p444 = pneg %p210
        $region30: #{generator_block_apply.3} parent=11 // pred_check_branch
          %446 = sbr.rel (%p444) target = $region32
        $region31: #{generator_block_apply.3} parent=11 // pred_region
          %s448 = ssub.s32 32, 32
          %449 = vsyncadd [#allocation12], %s448
          %s451 = sshll.u32 [#allocation13], 4
          %s452 = int_to_ptr.vmem [resolvable:$true] %s451
          %454 = dma.hbm_to_vmem [thread:$0]  %s6, 32, %s452, [#allocation12]
        $region32: #{generator_block_apply.3} parent=11 // pred_fallthru
          _
        // Predicated region
        $region33: #{generator_block_apply.3} parent=11 // pred_check
          %p455 = pneg %p231
        $region34: #{generator_block_apply.3} parent=11 // pred_check_branch
          %457 = sbr.rel (%p455) target = $region36
        $region35: #{generator_block_apply.3} parent=11 // pred_region
          %s459 = ssub.s32 64, 64
          %460 = vsyncadd [#allocation15], %s459
          %s462 = sshll.u32 [#allocation14], 4
          %s463 = int_to_ptr.vmem [resolvable:$true] %s462
          %465 = dma.hbm_to_vmem [thread:$0]  %s7, 64, %s463, [#allocation15]
        $region36: #{generator_block_apply.3} parent=11 // pred_fallthru
          _
        // Predicated region
        $region37: #{generator_block_apply.3} parent=11 // pred_check
          %p466 = pneg %p252
        $region38: #{generator_block_apply.3} parent=11 // pred_check_branch
          %468 = sbr.rel (%p466) target = $region40
        $region39: #{generator_block_apply.3} parent=11 // pred_region
          %s470 = ssub.s32 32, 32
          %471 = vsyncadd [#allocation15], %s470
          %s473 = sshll.u32 [#allocation16], 4
          %s474 = int_to_ptr.vmem [resolvable:$true] %s473
          %476 = dma.hbm_to_vmem [thread:$0]  %s8, 32, %s474, [#allocation15]
        $region40: #{generator_block_apply.3} parent=11 // pred_fallthru
          _
        // Predicated region
        $region41: #{generator_block_apply.3} parent=11 // pred_check
          %p477 = pneg %p273
        $region42: #{generator_block_apply.3} parent=11 // pred_check_branch
          %479 = sbr.rel (%p477) target = $region44
        $region43: #{generator_block_apply.3} parent=11 // pred_region
          %s481 = ssub.s32 64, 64
          %482 = vsyncadd [#allocation18], %s481
          %s484 = sshll.u32 [#allocation17], 4
          %s485 = int_to_ptr.vmem [resolvable:$true] %s484
          %487 = dma.hbm_to_vmem [thread:$0]  %s9, 64, %s485, [#allocation18]
        $region44: #{generator_block_apply.3} parent=11 // pred_fallthru
          _
        // Predicated region
        $region45: #{generator_block_apply.3} parent=11 // pred_check
          %p488 = pneg %p294
        $region46: #{generator_block_apply.3} parent=11 // pred_check_branch
          %490 = sbr.rel (%p488) target = $region48
        $region47: #{generator_block_apply.3} parent=11 // pred_region
          %s492 = ssub.s32 32, 32
          %493 = vsyncadd [#allocation18], %s492
          %s495 = sshll.u32 [#allocation19], 4
          %s496 = int_to_ptr.vmem [resolvable:$true] %s495
          %498 = dma.hbm_to_vmem [thread:$0]  %s10, 32, %s496, [#allocation18]
        $region48: #{generator_block_apply.3} parent=11 // pred_fallthru
          _
        // Predicated region
        $region49: #{generator_block_apply.3} parent=11 // pred_check
          %p499 = pneg %p315
        $region50: #{generator_block_apply.3} parent=11 // pred_check_branch
          %501 = sbr.rel (%p499) target = $region52
        $region51: #{generator_block_apply.3} parent=11 // pred_region
          %s503 = ssub.s32 64, 64
          %504 = vsyncadd [#allocation21], %s503
          %s506 = sshll.u32 [#allocation20], 4
          %s507 = int_to_ptr.vmem [resolvable:$true] %s506
          %509 = dma.hbm_to_vmem [thread:$0]  %s11, 64, %s507, [#allocation21]
        $region52: #{generator_block_apply.3} parent=11 // pred_fallthru
          _
        // Predicated region
        $region53: #{generator_block_apply.3} parent=11 // pred_check
          %p510 = pneg %p336
        $region54: #{generator_block_apply.3} parent=11 // pred_check_branch
          %512 = sbr.rel (%p510) target = $region56
        $region55: #{generator_block_apply.3} parent=11 // pred_region
          %s514 = ssub.s32 32, 32
          %515 = vsyncadd [#allocation21], %s514
          %s517 = sshll.u32 [#allocation22], 4
          %s518 = int_to_ptr.vmem [resolvable:$true] %s517
          %520 = dma.hbm_to_vmem [thread:$0]  %s12, 32, %s518, [#allocation21]
        $region56: #{generator_block_apply.3} parent=11 // pred_fallthru
          _
        // Predicated region
        $region57: #{generator_block_apply.3} parent=11 // pred_check
          %p521 = pneg %p357
        $region58: #{generator_block_apply.3} parent=11 // pred_check_branch
          %523 = sbr.rel (%p521) target = $region60
        $region59: #{generator_block_apply.3} parent=11 // pred_region
          %s525 = ssub.s32 64, 64
          %526 = vsyncadd [#allocation24], %s525
          %s528 = sshll.u32 [#allocation23], 4
          %s529 = int_to_ptr.vmem [resolvable:$true] %s528
          %531 = dma.hbm_to_vmem [thread:$0]  %s13, 64, %s529, [#allocation24]
        $region60: #{generator_block_apply.3} parent=11 // pred_fallthru
          _
      $region12: #{generator_block_apply.3} parent=5 // pred_fallthru
        _
      %p532 = scmp.lt.s32.totalorder %s35, 2
      // Predicated region
      $region61: #{generator_block_apply.3} parent=5 // pred_check
        %p533 = pneg %p532
      $region62: #{generator_block_apply.3} parent=5 // pred_check_branch
        %535 = sbr.rel (%p533) target = $region64
      $region63: #{generator_block_apply.3} parent=5 // pred_region
        // Predicated region
        $region65: #{generator_block_apply.3} parent=63 // pred_check
          %p536 = pneg %p69
        $region66: #{generator_block_apply.3} parent=63 // pred_check_branch
          %538 = sbr.rel (%p536) target = $region68
        $region67: #{generator_block_apply.3} parent=63 // pred_region
          %s539 = sand.u32 %s59, 1
          %s540 = scalar_lea.sflag [#allocation3], %s539
          %s541 = sand.u32 %s59, 1
          %s542 = smul.addr %s541, 2
          %s543 = scalar_lea.vmem [#allocation2], %s542
          %s545 = ssub.s32 32, 32
          %546 = vsyncadd %s540, %s545
          %s547 = smul.addr %s42, 2
          %s548 = sadd.s32 %s43, %s547
          %s549 = smul.addr %s548, 32
          %s550 = scalar_lea.hbm %s0, %s549
          %s552 = sshll.u32 %s543, 4
          %s553 = int_to_ptr.vmem [resolvable:$true] %s552
          %555 = dma.hbm_to_vmem [thread:$0]  %s550, 32, %s553, %s540
        $region68: #{generator_block_apply.3} parent=63 // pred_fallthru
          _
        // Predicated region
        $region69: #{generator_block_apply.3} parent=63 // pred_check
          %p556 = pneg %p99
        $region70: #{generator_block_apply.3} parent=63 // pred_check_branch
          %558 = sbr.rel (%p556) target = $region72
        $region71: #{generator_block_apply.3} parent=63 // pred_region
          %s559 = sand.u32 %s35, 1
          %s560 = scalar_lea.sflag [#allocation6], %s559
          %s561 = sand.u32 %s89, 1
          %s562 = smul.addr %s561, 2
          %s563 = scalar_lea.vmem [#allocation5], %s562
          %s564 = sadd.s32 %s43, 1
          %s566 = ssub.s32 32, 32
          %567 = vsyncadd %s560, %s566
          %s568 = smul.addr %s42, 2
          %s569 = sadd.s32 %s564, %s568
          %s570 = smul.addr %s569, 32
          %s571 = scalar_lea.hbm %s1, %s570
          %s573 = sshll.u32 %s563, 4
          %s574 = int_to_ptr.vmem [resolvable:$true] %s573
          %576 = dma.hbm_to_vmem [thread:$0]  %s571, 32, %s574, %s560
        $region72: #{generator_block_apply.3} parent=63 // pred_fallthru
          _
      $region64: #{generator_block_apply.3} parent=5 // pred_fallthru
        _
      %p577 = scmp.le.s32.totalorder 1, %s35
      %p578 = scmp.lt.s32.totalorder %s35, 3
      %p579 = pnand %p577, %p578
      %p580 = pneg %p579
      // Predicated region
      $region73: #{generator_block_apply.3} parent=5 // pred_check
        _
      $region74: #{generator_block_apply.3} parent=5 // pred_check_branch
        %582 = sbr.rel (%p579) target = $region76
      $region75: #{generator_block_apply.3} parent=5 // pred_region
        %s583 = ssub.s32 %s35, 1
        %s584 = sand.u32 %s62, 1
        %s585 = scalar_lea.sflag [#allocation3], %s584
        %s586 = sand.u32 %s62, 1
        %s587 = smul.addr %s586, 2
        %s588 = scalar_lea.vmem [#allocation2], %s587
        // Predicated region
        $region77: #{generator_block_apply.3} parent=75 // pred_check
          %p589 = pneg %p75
        $region78: #{generator_block_apply.3} parent=75 // pred_check_branch
          %591 = sbr.rel (%p589) target = $region80
        $region79: #{generator_block_apply.3} parent=75 // pred_region
          %592 = dma.done %s585, 32
        $region80: #{generator_block_apply.3} parent=75 // pred_fallthru
          _
        %s593 = sand.u32 %s40, 1
        %s594 = scalar_lea.sflag [#allocation6], %s593
        %s595 = sand.u32 %s92, 1
        %s596 = smul.addr %s595, 2
        %s597 = scalar_lea.vmem [#allocation5], %s596
        // Predicated region
        $region81: #{generator_block_apply.3} parent=75 // pred_check
          %p598 = pneg %p105
        $region82: #{generator_block_apply.3} parent=75 // pred_check_branch
          %600 = sbr.rel (%p598) target = $region84
        $region83: #{generator_block_apply.3} parent=75 // pred_region
          %601 = dma.done %s594, 32
        $region84: #{generator_block_apply.3} parent=75 // pred_fallthru
          _
        // Predicated region
        $region85: #{generator_block_apply.3} parent=75 // pred_check
          %p602 = pneg %p126
        $region86: #{generator_block_apply.3} parent=75 // pred_check_branch
          %604 = sbr.rel (%p602) target = $region88
        $region87: #{generator_block_apply.3} parent=75 // pred_region
          %605 = dma.done [#allocation6], 32
        $region88: #{generator_block_apply.3} parent=75 // pred_fallthru
          _
        // Predicated region
        $region89: #{generator_block_apply.3} parent=75 // pred_check
          %p606 = pneg %p147
        $region90: #{generator_block_apply.3} parent=75 // pred_check_branch
          %608 = sbr.rel (%p606) target = $region92
        $region91: #{generator_block_apply.3} parent=75 // pred_region
          %609 = dma.done [#allocation9], 64
        $region92: #{generator_block_apply.3} parent=75 // pred_fallthru
          _
        // Predicated region
        $region93: #{generator_block_apply.3} parent=75 // pred_check
          %p610 = pneg %p168
        $region94: #{generator_block_apply.3} parent=75 // pred_check_branch
          %612 = sbr.rel (%p610) target = $region96
        $region95: #{generator_block_apply.3} parent=75 // pred_region
          %613 = dma.done [#allocation9], 32
        $region96: #{generator_block_apply.3} parent=75 // pred_fallthru
          _
        // Predicated region
        $region97: #{generator_block_apply.3} parent=75 // pred_check
          %p614 = pneg %p189
        $region98: #{generator_block_apply.3} parent=75 // pred_check_branch
          %616 = sbr.rel (%p614) target = $region100
        $region99: #{generator_block_apply.3} parent=75 // pred_region
          %617 = dma.done [#allocation12], 64
        $region100: #{generator_block_apply.3} parent=75 // pred_fallthru
          _
        // Predicated region
        $region101: #{generator_block_apply.3} parent=75 // pred_check
          %p618 = pneg %p210
        $region102: #{generator_block_apply.3} parent=75 // pred_check_branch
          %620 = sbr.rel (%p618) target = $region104
        $region103: #{generator_block_apply.3} parent=75 // pred_region
          %621 = dma.done [#allocation12], 32
        $region104: #{generator_block_apply.3} parent=75 // pred_fallthru
          _
        // Predicated region
        $region105: #{generator_block_apply.3} parent=75 // pred_check
          %p622 = pneg %p231
        $region106: #{generator_block_apply.3} parent=75 // pred_check_branch
          %624 = sbr.rel (%p622) target = $region108
        $region107: #{generator_block_apply.3} parent=75 // pred_region
          %625 = dma.done [#allocation15], 64
        $region108: #{generator_block_apply.3} parent=75 // pred_fallthru
          _
        // Predicated region
        $region109: #{generator_block_apply.3} parent=75 // pred_check
          %p626 = pneg %p252
        $region110: #{generator_block_apply.3} parent=75 // pred_check_branch
          %628 = sbr.rel (%p626) target = $region112
        $region111: #{generator_block_apply.3} parent=75 // pred_region
          %629 = dma.done [#allocation15], 32
        $region112: #{generator_block_apply.3} parent=75 // pred_fallthru
          _
        // Predicated region
        $region113: #{generator_block_apply.3} parent=75 // pred_check
          %p630 = pneg %p273
        $region114: #{generator_block_apply.3} parent=75 // pred_check_branch
          %632 = sbr.rel (%p630) target = $region116
        $region115: #{generator_block_apply.3} parent=75 // pred_region
          %633 = dma.done [#allocation18], 64
        $region116: #{generator_block_apply.3} parent=75 // pred_fallthru
          _
        // Predicated region
        $region117: #{generator_block_apply.3} parent=75 // pred_check
          %p634 = pneg %p294
        $region118: #{generator_block_apply.3} parent=75 // pred_check_branch
          %636 = sbr.rel (%p634) target = $region120
        $region119: #{generator_block_apply.3} parent=75 // pred_region
          %637 = dma.done [#allocation18], 32
        $region120: #{generator_block_apply.3} parent=75 // pred_fallthru
          _
        // Predicated region
        $region121: #{generator_block_apply.3} parent=75 // pred_check
          %p638 = pneg %p315
        $region122: #{generator_block_apply.3} parent=75 // pred_check_branch
          %640 = sbr.rel (%p638) target = $region124
        $region123: #{generator_block_apply.3} parent=75 // pred_region
          %641 = dma.done [#allocation21], 64
        $region124: #{generator_block_apply.3} parent=75 // pred_fallthru
          _
        // Predicated region
        $region125: #{generator_block_apply.3} parent=75 // pred_check
          %p642 = pneg %p336
        $region126: #{generator_block_apply.3} parent=75 // pred_check_branch
          %644 = sbr.rel (%p642) target = $region128
        $region127: #{generator_block_apply.3} parent=75 // pred_region
          %645 = dma.done [#allocation21], 32
        $region128: #{generator_block_apply.3} parent=75 // pred_fallthru
          _
        // Predicated region
        $region129: #{generator_block_apply.3} parent=75 // pred_check
          %p646 = pneg %p357
        $region130: #{generator_block_apply.3} parent=75 // pred_check_branch
          %648 = sbr.rel (%p646) target = $region132
        $region131: #{generator_block_apply.3} parent=75 // pred_region
          %649 = dma.done [#allocation24], 64
        $region132: #{generator_block_apply.3} parent=75 // pred_fallthru
          _
        %s650 = sand.u32 %s62, 1
        %s651 = scalar_lea.sflag [#allocation3], %s650
        %s652 = sand.u32 %s62, 1
        %s653 = smul.addr %s652, 2
        %s654 = scalar_lea.vmem [#allocation2], %s653
        %p655 = pneg %p75
        %p656 = pneg %p72
        %s657 = sand.u32 %s40, 1
        %s658 = scalar_lea.sflag [#allocation6], %s657
        %s659 = sand.u32 %s92, 1
        %s660 = smul.addr %s659, 2
        %s661 = scalar_lea.vmem [#allocation5], %s660
        %p662 = pneg %p105
        %p663 = pneg %p102
        %p664 = pneg %p126
        %p665 = pneg %p123
        %p666 = pneg %p147
        %p667 = pneg %p144
        %p668 = pneg %p168
        %p669 = pneg %p165
        %p670 = pneg %p189
        %p671 = pneg %p186
        %p672 = pneg %p210
        %p673 = pneg %p207
        %p674 = pneg %p231
        %p675 = pneg %p228
        %p676 = pneg %p252
        %p677 = pneg %p249
        %p678 = pneg %p273
        %p679 = pneg %p270
        %p680 = pneg %p294
        %p681 = pneg %p291
        %p682 = pneg %p315
        %p683 = pneg %p312
        %p684 = pneg %p336
        %p685 = pneg %p333
        %p686 = pneg %p357
        %p687 = pneg %p354
        %p688 = pneg %p385
        %p689 = pneg %p382
        %s690 = sand.u32 %s372, 1
        %s691 = scalar_lea.sflag [#allocation4], %s690
        %s692 = sand.u32 %s372, 1
        %s693 = smul.addr %s692, 4
        %s694 = scalar_lea.vmem [#allocation25], %s693
        %s695 = sadd.s32 %s45, 1
        %v697 = vld [vmem:[%s588] sm:$0x3]
        %v698 = vld [vmem:[%s597] sm:$0x3]
        %v699 = vunpack.c.l.bf16 %v697
        %v700 = vunpack.c.l.bf16 %v698
        %vm701 = vcmp.gt.f32.partialorder %v699, 0.0
        %vm702 = vcmp.gt.f32.partialorder %v700, 0.0
        %v703 = vmul.f32 %v699, 0.01
        %v704 = vmul.f32 %v700, 0.01
        %v705 = vsel %vm701, %v699, %v703
        %v706 = vsel %vm702, %v700, %v704
        %v707 = vpack.c.bf16 %v705, %v705
        %v708 = vpack.c.bf16 %v706, %v706
        %v711 = vrot.slane %v707, 6
        %v712 = vrot.slane %v708, 6
        %713 = vrot.lane.b32.xlu0 %v711, 127
        %v714 = vpop.permute.xlu0 %713
        %715 = vrot.lane.b32.xlu0 %v712, 127
        %v716 = vpop.permute.xlu0 %715
        %vm717 = vcmask 1039360
        %v718 = vsel %vm717, %v714, %v716
        %v719 = vrot.slane %v707, 4
        %v720 = vrot.slane %v708, 4
        %721 = vrot.lane.b32.xlu0 %v719, 126
        %v722 = vpop.permute.xlu0 %721
        %723 = vrot.lane.b32.xlu0 %v720, 126
        %v724 = vpop.permute.xlu0 %723
        %vm725 = vcmask 1031168
        %v726 = vsel %vm725, %v722, %v724
        %vm727 = vcmask 1041408
        %v730 = vsel %vm727, %v707, %v718
        %v733 = vsel %vm727, %v708, %v716
        %vm734 = vcmask 1043456
        %v736 = vsel %vm734, %v730, %v726
        %v738 = vsel %vm734, %v733, %v724
        %v739 = vld [vmem:[#allocation7] sm:$0x3]
        %v740 = vld [vmem:[#allocation8] sm:$0xf]
        %742 = vset.pattern.permute.xlu0 0
        %743 = vperm.xlu0 %742, %v740
        %v744 = vpop.permute.xlu0 %743
        %748 = vrot.lane.b32.xlu0 %v736, 126
        %v749 = vpop.permute.xlu0 %748
        %750 = vrot.lane.b32.xlu0 %v738, 126
        %v751 = vpop.permute.xlu0 %750
        %v752 = vsel %vm725, %v749, %v751
        %vm753 = vcmask 97280
        %v755 = vsel %vm753, %v739, 0
        %vm757 = vcmask 1045504
        %v759 = vsel %vm757, %v752, 0
        %v762 = vsel %vm757, %v751, 0
        %764 = vmatprep.subr.bf16.mxu0 %v762
        %765 = vmatpush1.bf16.msra.mxu0 %v759
        %766 = vmatprep.subr.bf16.mxu0 0
        %767 = vmatpush1.bf16.msra.mxu0 0
        %768 = vmatprep.subr.bf16.mxu0 0
        %769 = vmatpush1.bf16.msra.mxu0 0
        %770 = vmatprep.subr.bf16.mxu0 0
        %771 = vmatpush1.bf16.msra.mxu0 0
        %772 = vmatprep.subr.bf16.mxu0 0
        %773 = vmatpush1.bf16.msra.mxu0 0
        %774 = vmatprep.subr.bf16.mxu0 0
        %775 = vmatpush1.bf16.msra.mxu0 0
        %776 = vmatprep.subr.bf16.mxu0 0
        %777 = vmatpush1.bf16.msra.mxu0 0
        %778 = vmatprep.subr.bf16.mxu0 0
        %779 = vmatpush1.bf16.msra.mxu0 0
        %780 = vmatprep.subr.bf16.mxu0 0
        %781 = vmatpush1.bf16.msra.mxu0 0
        %782 = vmatprep.subr.bf16.mxu0 0
        %783 = vmatpush1.bf16.msra.mxu0 0
        %784 = vmatprep.subr.bf16.mxu0 0
        %785 = vmatpush1.bf16.msra.mxu0 0
        %786 = vmatprep.subr.bf16.mxu0 0
        %787 = vmatpush1.bf16.msra.mxu0 0
        %788 = vmatprep.subr.bf16.mxu0 0
        %789 = vmatpush1.bf16.msra.mxu0 0
        %790 = vmatprep.subr.bf16.mxu0 0
        %791 = vmatpush1.bf16.msra.mxu0 0
        %792 = vmatprep.subr.bf16.mxu0 0
        %793 = vmatpush1.bf16.msra.mxu0 0
        %794 = vmatprep.subr.bf16.mxu0 0
        %795 = vmatpush1.bf16.msra.mxu0 0
        %796 = vmatprep.mubr.bf16.mxu0 0
        %797 = vmatmul.mubr.bf16.gmra.mrb[0].mxu0 %v755
        %v798 = vpop.f32.mrb[0].mxu0
        %v799 = vadd.f32 %v744, %v798
        %v800 = vpop.f32.mrb[0].mxu0
        %v801 = vadd.f32 %v744, %v800
        %v802 = vpop.f32.mrb[0].mxu0
        %v803 = vpop.f32.mrb[0].mxu0
        %804 = vdwg.mxu0
        %vm805 = vcmp.gt.f32.partialorder %v799, 0.0
        %vm806 = vcmp.gt.f32.partialorder %v801, 0.0
        %v807 = vmul.f32 %v799, 0.01
        %v808 = vmul.f32 %v801, 0.01
        %v809 = vsel %vm805, %v799, %v807
        %v810 = vsel %vm806, %v801, %v808
        %s811 = smul.u32 %s45, 128
        %s812 = ssub.s32 %s811, 1
        %v813 = vlaneseq
        %v814 = vand.u32 %v813, 127
        %v815 = vadd.s32 %v814, 128
        %v816 = vstv %s812
        %v817 = vadd.s32 %v816, %v814
        %v818 = vadd.s32 %v816, %v815
        %vm819 = vcmp.ge.s32.totalorder %v817, 0
        %vm820 = vcmp.ge.s32.totalorder %v818, 0
        %vm821 = vcmp.lt.s32.totalorder %v817, 32
        %vm822 = vcmp.lt.s32.totalorder %v818, 32
        %vm823 = vmand %vm819, %vm821
        %vm824 = vmand %vm820, %vm822
        %v825 = vsel %vm823, 1, 0
        %v826 = vsel %vm824, 1, 0
        %vm827 = vcmp.eq.s32.totalorder %v825, 1
        %vm828 = vcmp.eq.s32.totalorder %v826, 1
        %v829 = vsel %vm827, %v809, 0.0
        %v830 = vsel %vm828, %v810, 0.0
        %v831 = vpack.c.bf16 %v829, %v829
        %v832 = vpack.c.bf16 %v830, %v830
        %v835 = vrot.slane %v831, 6
        %v836 = vrot.slane %v832, 6
        %837 = vrot.lane.b32.xlu0 %v835, 127
        %v838 = vpop.permute.xlu0 %837
        %839 = vrot.lane.b32.xlu0 %v836, 127
        %v840 = vpop.permute.xlu0 %839
        %v841 = vsel %vm717, %v838, %v840
        %v842 = vrot.slane %v831, 4
        %v843 = vrot.slane %v832, 4
        %844 = vrot.lane.b32.xlu0 %v842, 126
        %v845 = vpop.permute.xlu0 %844
        %846 = vrot.lane.b32.xlu0 %v843, 126
        %v847 = vpop.permute.xlu0 %846
        %v848 = vsel %vm725, %v845, %v847
        %v851 = vsel %vm727, %v831, %v841
        %v853 = vsel %vm734, %v851, %v848
        %v854 = vld [vmem:[#allocation10] sm:$0x3]
        %v855 = vld [vmem:[#allocation11] sm:$0xf]
        %857 = vset.pattern.permute.xlu0 0
        %858 = vperm.xlu0 %857, %v855
        %v859 = vpop.permute.xlu0 %858
        %v862 = vsel %vm753, %v854, 0
        %v864 = vsel %vm757, %v853, 0
        %866 = vmatprep.subr.bf16.mxu0 0
        %867 = vmatpush1.bf16.msra.mxu0 %v864
        %868 = vmatprep.subr.bf16.mxu0 0
        %869 = vmatpush1.bf16.msra.mxu0 0
        %870 = vmatprep.subr.bf16.mxu0 0
        %871 = vmatpush1.bf16.msra.mxu0 0
        %872 = vmatprep.subr.bf16.mxu0 0
        %873 = vmatpush1.bf16.msra.mxu0 0
        %874 = vmatprep.subr.bf16.mxu0 0
        %875 = vmatpush1.bf16.msra.mxu0 0
        %876 = vmatprep.subr.bf16.mxu0 0
        %877 = vmatpush1.bf16.msra.mxu0 0
        %878 = vmatprep.subr.bf16.mxu0 0
        %879 = vmatpush1.bf16.msra.mxu0 0
        %880 = vmatprep.subr.bf16.mxu0 0
        %881 = vmatpush1.bf16.msra.mxu0 0
        %882 = vmatprep.subr.bf16.mxu0 0
        %883 = vmatpush1.bf16.msra.mxu0 0
        %884 = vmatprep.subr.bf16.mxu0 0
        %885 = vmatpush1.bf16.msra.mxu0 0
        %886 = vmatprep.subr.bf16.mxu0 0
        %887 = vmatpush1.bf16.msra.mxu0 0
        %888 = vmatprep.subr.bf16.mxu0 0
        %889 = vmatpush1.bf16.msra.mxu0 0
        %890 = vmatprep.subr.bf16.mxu0 0
        %891 = vmatpush1.bf16.msra.mxu0 0
        %892 = vmatprep.subr.bf16.mxu0 0
        %893 = vmatpush1.bf16.msra.mxu0 0
        %894 = vmatprep.subr.bf16.mxu0 0
        %895 = vmatpush1.bf16.msra.mxu0 0
        %896 = vmatprep.subr.bf16.mxu0 0
        %897 = vmatpush1.bf16.msra.mxu0 0
        %898 = vmatprep.mubr.bf16.mxu0 0
        %899 = vmatmul.mubr.bf16.gmra.mrb[0].mxu0 %v862
        %v900 = vpop.f32.mrb[0].mxu0
        %v901 = vadd.f32 %v859, %v900
        %v902 = vpop.f32.mrb[0].mxu0
        %v903 = vpop.f32.mrb[0].mxu0
        %v904 = vpop.f32.mrb[0].mxu0
        %905 = vdwg.mxu0
        %v906 = vadd.f32 %v901, 0.0
        %907 = vrot.lane.b32.xlu0 %v711, 125
        %v908 = vpop.permute.xlu0 %907
        %909 = vrot.lane.b32.xlu0 %v712, 125
        %v910 = vpop.permute.xlu0 %909
        %vm911 = vcmask 1022976
        %v912 = vsel %vm911, %v908, %v910
        %913 = vrot.lane.b32.xlu0 %v719, 122
        %v914 = vpop.permute.xlu0 %913
        %915 = vrot.lane.b32.xlu0 %v720, 122
        %v916 = vpop.permute.xlu0 %915
        %vm917 = vcmask 998400
        %v918 = vsel %vm917, %v914, %v916
        %v920 = vsel %vm727, %v707, %v912
        %v922 = vsel %vm727, %v708, %v910
        %v924 = vsel %vm734, %v920, %v918
        %v926 = vsel %vm734, %v922, %v916
        %v927 = vld [vmem:[#allocation13] sm:$0x3]
        %v928 = vld [vmem:[#allocation14] sm:$0xf]
        %930 = vset.pattern.permute.xlu0 0
        %931 = vperm.xlu0 %930, %v928
        %v932 = vpop.permute.xlu0 %931
        %v935 = vsel %vm753, %v927, 0
        %v937 = vsel %vm757, %v924, 0
        %v939 = vsel %vm757, %v926, 0
        %941 = vmatprep.subr.bf16.mxu0 %v939
        %942 = vmatpush1.bf16.msra.mxu0 %v937
        %943 = vmatprep.subr.bf16.mxu0 0
        %944 = vmatpush1.bf16.msra.mxu0 0
        %945 = vmatprep.subr.bf16.mxu0 0
        %946 = vmatpush1.bf16.msra.mxu0 0
        %947 = vmatprep.subr.bf16.mxu0 0
        %948 = vmatpush1.bf16.msra.mxu0 0
        %949 = vmatprep.subr.bf16.mxu0 0
        %950 = vmatpush1.bf16.msra.mxu0 0
        %951 = vmatprep.subr.bf16.mxu0 0
        %952 = vmatpush1.bf16.msra.mxu0 0
        %953 = vmatprep.subr.bf16.mxu0 0
        %954 = vmatpush1.bf16.msra.mxu0 0
        %955 = vmatprep.subr.bf16.mxu0 0
        %956 = vmatpush1.bf16.msra.mxu0 0
        %957 = vmatprep.subr.bf16.mxu0 0
        %958 = vmatpush1.bf16.msra.mxu0 0
        %959 = vmatprep.subr.bf16.mxu0 0
        %960 = vmatpush1.bf16.msra.mxu0 0
        %961 = vmatprep.subr.bf16.mxu0 0
        %962 = vmatpush1.bf16.msra.mxu0 0
        %963 = vmatprep.subr.bf16.mxu0 0
        %964 = vmatpush1.bf16.msra.mxu0 0
        %965 = vmatprep.subr.bf16.mxu0 0
        %966 = vmatpush1.bf16.msra.mxu0 0
        %967 = vmatprep.subr.bf16.mxu0 0
        %968 = vmatpush1.bf16.msra.mxu0 0
        %969 = vmatprep.subr.bf16.mxu0 0
        %970 = vmatpush1.bf16.msra.mxu0 0
        %971 = vmatprep.subr.bf16.mxu0 0
        %972 = vmatpush1.bf16.msra.mxu0 0
        %973 = vmatprep.mubr.bf16.mxu0 0
        %974 = vmatmul.mubr.bf16.gmra.mrb[0].mxu0 %v935
        %v975 = vpop.f32.mrb[0].mxu0
        %v976 = vadd.f32 %v932, %v975
        %v977 = vpop.f32.mrb[0].mxu0
        %v978 = vadd.f32 %v932, %v977
        %v979 = vpop.f32.mrb[0].mxu0
        %v980 = vpop.f32.mrb[0].mxu0
        %981 = vdwg.mxu0
        %vm982 = vcmp.gt.f32.partialorder %v976, 0.0
        %vm983 = vcmp.gt.f32.partialorder %v978, 0.0
        %v984 = vmul.f32 %v976, 0.01
        %v985 = vmul.f32 %v978, 0.01
        %v986 = vsel %vm982, %v976, %v984
        %v987 = vsel %vm983, %v978, %v985
        %v988 = vsel %vm827, %v986, 0.0
        %v989 = vsel %vm828, %v987, 0.0
        %v990 = vpack.c.bf16 %v988, %v988
        %v991 = vpack.c.bf16 %v989, %v989
        %v994 = vrot.slane %v990, 6
        %v995 = vrot.slane %v991, 6
        %996 = vrot.lane.b32.xlu0 %v994, 127
        %v997 = vpop.permute.xlu0 %996
        %998 = vrot.lane.b32.xlu0 %v995, 127
        %v999 = vpop.permute.xlu0 %998
        %v1000 = vsel %vm717, %v997, %v999
        %v1001 = vrot.slane %v990, 4
        %v1002 = vrot.slane %v991, 4
        %1003 = vrot.lane.b32.xlu0 %v1001, 126
        %v1004 = vpop.permute.xlu0 %1003
        %1005 = vrot.lane.b32.xlu0 %v1002, 126
        %v1006 = vpop.permute.xlu0 %1005
        %v1007 = vsel %vm725, %v1004, %v1006
        %v1010 = vsel %vm727, %v990, %v1000
        %v1012 = vsel %vm734, %v1010, %v1007
        %v1013 = vld [vmem:[#allocation16] sm:$0x3]
        %v1014 = vld [vmem:[#allocation17] sm:$0xf]
        %1016 = vset.pattern.permute.xlu0 0
        %1017 = vperm.xlu0 %1016, %v1014
        %v1018 = vpop.permute.xlu0 %1017
        %v1021 = vsel %vm753, %v1013, 0
        %v1023 = vsel %vm757, %v1012, 0
        %1025 = vmatprep.subr.bf16.mxu0 0
        %1026 = vmatpush1.bf16.msra.mxu0 %v1023
        %1027 = vmatprep.subr.bf16.mxu0 0
        %1028 = vmatpush1.bf16.msra.mxu0 0
        %1029 = vmatprep.subr.bf16.mxu0 0
        %1030 = vmatpush1.bf16.msra.mxu0 0
        %1031 = vmatprep.subr.bf16.mxu0 0
        %1032 = vmatpush1.bf16.msra.mxu0 0
        %1033 = vmatprep.subr.bf16.mxu0 0
        %1034 = vmatpush1.bf16.msra.mxu0 0
        %1035 = vmatprep.subr.bf16.mxu0 0
        %1036 = vmatpush1.bf16.msra.mxu0 0
        %1037 = vmatprep.subr.bf16.mxu0 0
        %1038 = vmatpush1.bf16.msra.mxu0 0
        %1039 = vmatprep.subr.bf16.mxu0 0
        %1040 = vmatpush1.bf16.msra.mxu0 0
        %1041 = vmatprep.subr.bf16.mxu0 0
        %1042 = vmatpush1.bf16.msra.mxu0 0
        %1043 = vmatprep.subr.bf16.mxu0 0
        %1044 = vmatpush1.bf16.msra.mxu0 0
        %1045 = vmatprep.subr.bf16.mxu0 0
        %1046 = vmatpush1.bf16.msra.mxu0 0
        %1047 = vmatprep.subr.bf16.mxu0 0
        %1048 = vmatpush1.bf16.msra.mxu0 0
        %1049 = vmatprep.subr.bf16.mxu0 0
        %1050 = vmatpush1.bf16.msra.mxu0 0
        %1051 = vmatprep.subr.bf16.mxu0 0
        %1052 = vmatpush1.bf16.msra.mxu0 0
        %1053 = vmatprep.subr.bf16.mxu0 0
        %1054 = vmatpush1.bf16.msra.mxu0 0
        %1055 = vmatprep.subr.bf16.mxu0 0
        %1056 = vmatpush1.bf16.msra.mxu0 0
        %1057 = vmatprep.mubr.bf16.mxu0 0
        %1058 = vmatmul.mubr.bf16.gmra.mrb[0].mxu0 %v1021
        %v1059 = vpop.f32.mrb[0].mxu0
        %v1060 = vadd.f32 %v1018, %v1059
        %v1061 = vpop.f32.mrb[0].mxu0
        %v1062 = vpop.f32.mrb[0].mxu0
        %v1063 = vpop.f32.mrb[0].mxu0
        %1064 = vdwg.mxu0
        %v1065 = vadd.f32 %v906, %v1060
        %v1066 = vrot.slane %v707, 2
        %v1067 = vrot.slane %v708, 2
        %1068 = vrot.lane.b32.xlu0 %v1066, 125
        %v1069 = vpop.permute.xlu0 %1068
        %1070 = vrot.lane.b32.xlu0 %v1067, 125
        %v1071 = vpop.permute.xlu0 %1070
        %v1072 = vsel %vm911, %v1069, %v1071
        %1073 = vrot.lane.b32.xlu0 %v707, 124
        %v1074 = vpop.permute.xlu0 %1073
        %1075 = vrot.lane.b32.xlu0 %v708, 124
        %v1076 = vpop.permute.xlu0 %1075
        %vm1077 = vcmask 1014784
        %v1078 = vsel %vm1077, %v1074, %v1076
        %v1080 = vsel %vm757, %v736, %v1072
        %v1083 = vsel %vm757, %v738, %v1071
        %v1085 = vld [vmem:[#allocation19] sm:$0x3]
        %v1086 = vld [vmem:[#allocation20] sm:$0xf]
        %1088 = vset.pattern.permute.xlu0 0
        %1089 = vperm.xlu0 %1088, %v1086
        %v1090 = vpop.permute.xlu0 %1089
        %vm1092 = vcmask 162816
        %v1094 = vsel %vm1092, %v1085, 0
        %v1097 = vsel %vm727, %v1078, 0
        %v1100 = vsel %vm727, %v1076, 0
        %1102 = vmatprep.subr.bf16.mxu0 %v1083
        %1103 = vmatpush1.bf16.msra.mxu0 %v1080
        %1104 = vmatprep.subr.bf16.mxu0 %v1100
        %1105 = vmatpush1.bf16.msra.mxu0 %v1097
        %1106 = vmatprep.subr.bf16.mxu0 0
        %1107 = vmatpush1.bf16.msra.mxu0 0
        %1108 = vmatprep.subr.bf16.mxu0 0
        %1109 = vmatpush1.bf16.msra.mxu0 0
        %1110 = vmatprep.subr.bf16.mxu0 0
        %1111 = vmatpush1.bf16.msra.mxu0 0
        %1112 = vmatprep.subr.bf16.mxu0 0
        %1113 = vmatpush1.bf16.msra.mxu0 0
        %1114 = vmatprep.subr.bf16.mxu0 0
        %1115 = vmatpush1.bf16.msra.mxu0 0
        %1116 = vmatprep.subr.bf16.mxu0 0
        %1117 = vmatpush1.bf16.msra.mxu0 0
        %1118 = vmatprep.subr.bf16.mxu0 0
        %1119 = vmatpush1.bf16.msra.mxu0 0
        %1120 = vmatprep.subr.bf16.mxu0 0
        %1121 = vmatpush1.bf16.msra.mxu0 0
        %1122 = vmatprep.subr.bf16.mxu0 0
        %1123 = vmatpush1.bf16.msra.mxu0 0
        %1124 = vmatprep.subr.bf16.mxu0 0
        %1125 = vmatpush1.bf16.msra.mxu0 0
        %1126 = vmatprep.subr.bf16.mxu0 0
        %1127 = vmatpush1.bf16.msra.mxu0 0
        %1128 = vmatprep.subr.bf16.mxu0 0
        %1129 = vmatpush1.bf16.msra.mxu0 0
        %1130 = vmatprep.subr.bf16.mxu0 0
        %1131 = vmatpush1.bf16.msra.mxu0 0
        %1132 = vmatprep.subr.bf16.mxu0 0
        %1133 = vmatpush1.bf16.msra.mxu0 0
        %1134 = vmatprep.mubr.bf16.mxu0 0
        %1135 = vmatmul.mubr.bf16.gmra.mrb[0].mxu0 %v1094
        %v1136 = vpop.f32.mrb[0].mxu0
        %v1137 = vadd.f32 %v1090, %v1136
        %v1138 = vpop.f32.mrb[0].mxu0
        %v1139 = vadd.f32 %v1090, %v1138
        %v1140 = vpop.f32.mrb[0].mxu0
        %v1141 = vpop.f32.mrb[0].mxu0
        %1142 = vdwg.mxu0
        %vm1143 = vcmp.gt.f32.partialorder %v1137, 0.0
        %vm1144 = vcmp.gt.f32.partialorder %v1139, 0.0
        %v1145 = vmul.f32 %v1137, 0.01
        %v1146 = vmul.f32 %v1139, 0.01
        %v1147 = vsel %vm1143, %v1137, %v1145
        %v1148 = vsel %vm1144, %v1139, %v1146
        %s1149 = ssub.s32 %s811, 2
        %v1150 = vstv %s1149
        %v1151 = vadd.s32 %v1150, %v814
        %v1152 = vadd.s32 %v1150, %v815
        %vm1153 = vcmp.ge.s32.totalorder %v1151, 0
        %vm1154 = vcmp.ge.s32.totalorder %v1152, 0
        %vm1155 = vcmp.lt.s32.totalorder %v1151, 32
        %vm1156 = vcmp.lt.s32.totalorder %v1152, 32
        %vm1157 = vmand %vm1153, %vm1155
        %vm1158 = vmand %vm1154, %vm1156
        %v1159 = vsel %vm1157, 1, 0
        %v1160 = vsel %vm1158, 1, 0
        %vm1161 = vcmp.eq.s32.totalorder %v1159, 1
        %vm1162 = vcmp.eq.s32.totalorder %v1160, 1
        %v1163 = vsel %vm1161, %v1147, 0.0
        %v1164 = vsel %vm1162, %v1148, 0.0
        %v1165 = vpack.c.bf16 %v1163, %v1163
        %v1166 = vpack.c.bf16 %v1164, %v1164
        %v1169 = vrot.slane %v1165, 6
        %v1170 = vrot.slane %v1166, 6
        %1171 = vrot.lane.b32.xlu0 %v1169, 127
        %v1172 = vpop.permute.xlu0 %1171
        %1173 = vrot.lane.b32.xlu0 %v1170, 127
        %v1174 = vpop.permute.xlu0 %1173
        %v1175 = vsel %vm717, %v1172, %v1174
        %v1176 = vrot.slane %v1165, 4
        %v1177 = vrot.slane %v1166, 4
        %1178 = vrot.lane.b32.xlu0 %v1176, 126
        %v1179 = vpop.permute.xlu0 %1178
        %1180 = vrot.lane.b32.xlu0 %v1177, 126
        %v1181 = vpop.permute.xlu0 %1180
        %v1182 = vsel %vm725, %v1179, %v1181
        %v1183 = vrot.slane %v1165, 2
        %v1184 = vrot.slane %v1166, 2
        %1185 = vrot.lane.b32.xlu0 %v1183, 125
        %v1186 = vpop.permute.xlu0 %1185
        %1187 = vrot.lane.b32.xlu0 %v1184, 125
        %v1188 = vpop.permute.xlu0 %1187
        %v1189 = vsel %vm911, %v1186, %v1188
        %1190 = vrot.lane.b32.xlu0 %v1165, 124
        %v1191 = vpop.permute.xlu0 %1190
        %1192 = vrot.lane.b32.xlu0 %v1166, 124
        %v1193 = vpop.permute.xlu0 %1192
        %v1194 = vsel %vm1077, %v1191, %v1193
        %v1197 = vsel %vm727, %v1165, %v1175
        %v1199 = vsel %vm734, %v1197, %v1182
        %v1201 = vsel %vm757, %v1199, %v1189
        %v1203 = vld [vmem:[#allocation22] sm:$0x3]
        %v1204 = vld [vmem:[#allocation23] sm:$0xf]
        %1206 = vset.pattern.permute.xlu0 0
        %1207 = vperm.xlu0 %1206, %v1204
        %v1208 = vpop.permute.xlu0 %1207
        %v1211 = vsel %vm1092, %v1203, 0
        %v1214 = vsel %vm727, %v1194, 0
        %1216 = vmatprep.subr.bf16.mxu0 0
        %1217 = vmatpush1.bf16.msra.mxu0 %v1201
        %1218 = vmatprep.subr.bf16.mxu0 0
        %1219 = vmatpush1.bf16.msra.mxu0 %v1214
        %1220 = vmatprep.subr.bf16.mxu0 0
        %1221 = vmatpush1.bf16.msra.mxu0 0
        %1222 = vmatprep.subr.bf16.mxu0 0
        %1223 = vmatpush1.bf16.msra.mxu0 0
        %1224 = vmatprep.subr.bf16.mxu0 0
        %1225 = vmatpush1.bf16.msra.mxu0 0
        %1226 = vmatprep.subr.bf16.mxu0 0
        %1227 = vmatpush1.bf16.msra.mxu0 0
        %1228 = vmatprep.subr.bf16.mxu0 0
        %1229 = vmatpush1.bf16.msra.mxu0 0
        %1230 = vmatprep.subr.bf16.mxu0 0
        %1231 = vmatpush1.bf16.msra.mxu0 0
        %1232 = vmatprep.subr.bf16.mxu0 0
        %1233 = vmatpush1.bf16.msra.mxu0 0
        %1234 = vmatprep.subr.bf16.mxu0 0
        %1235 = vmatpush1.bf16.msra.mxu0 0
        %1236 = vmatprep.subr.bf16.mxu0 0
        %1237 = vmatpush1.bf16.msra.mxu0 0
        %1238 = vmatprep.subr.bf16.mxu0 0
        %1239 = vmatpush1.bf16.msra.mxu0 0
        %1240 = vmatprep.subr.bf16.mxu0 0
        %1241 = vmatpush1.bf16.msra.mxu0 0
        %1242 = vmatprep.subr.bf16.mxu0 0
        %1243 = vmatpush1.bf16.msra.mxu0 0
        %1244 = vmatprep.subr.bf16.mxu0 0
        %1245 = vmatpush1.bf16.msra.mxu0 0
        %1246 = vmatprep.subr.bf16.mxu0 0
        %1247 = vmatpush1.bf16.msra.mxu0 0
        %1248 = vmatprep.mubr.bf16.mxu0 0
        %1249 = vmatmul.mubr.bf16.gmra.mrb[0].mxu0 %v1211
        %v1250 = vpop.f32.mrb[0].mxu0
        %v1251 = vadd.f32 %v1208, %v1250
        %v1252 = vpop.f32.mrb[0].mxu0
        %v1253 = vpop.f32.mrb[0].mxu0
        %v1254 = vpop.f32.mrb[0].mxu0
        %1255 = vdwg.mxu0
        %v1256 = vadd.f32 %v1065, %v1251
        %1257 = vst [vmem:[%s694] sm:$0xf] %v1256
        %s1258 = sand.u32 %s372, 1
        %s1259 = scalar_lea.sflag [#allocation4], %s1258
        %s1260 = sand.u32 %s372, 1
        %s1261 = smul.addr %s1260, 4
        %s1262 = scalar_lea.vmem [#allocation25], %s1261
        // Predicated region
        $region133: #{generator_block_apply.3} parent=75 // pred_check
          %p1263 = pneg %p382
        $region134: #{generator_block_apply.3} parent=75 // pred_check_branch
          %1265 = sbr.rel (%p1263) target = $region136
        $region135: #{generator_block_apply.3} parent=75 // pred_region
          %s1267 = ssub.s32 64, 64
          %1268 = vsyncadd %s1259, %s1267
          %s1269 = sadd.s32 %s45, %s44
          %s1270 = smul.addr %s1269, 64
          %s1271 = scalar_lea.hbm %s14, %s1270
          %s1273 = sshll.u32 %s1262, 4
          %s1274 = int_to_ptr.vmem [resolvable:$true] %s1273
          %1276 = dma.vmem_to_hbm [thread:$0]  %s1274, 64, %s1271, %s1259
        $region136: #{generator_block_apply.3} parent=75 // pred_fallthru
          _
      $region76: #{generator_block_apply.3} parent=5 // pred_fallthru
        _
      %p1277 = scmp.le.s32.totalorder 2, %s35
      // Predicated region
      $region137: #{generator_block_apply.3} parent=5 // pred_check
        %p1278 = pneg %p1277
      $region138: #{generator_block_apply.3} parent=5 // pred_check_branch
        %1280 = sbr.rel (%p1278) target = $region140
      $region139: #{generator_block_apply.3} parent=5 // pred_region
        %s1281 = ssub.s32 %s35, 2
        // Predicated region
        $region141: #{generator_block_apply.3} parent=139 // pred_check
          %p1282 = pneg %p388
        $region142: #{generator_block_apply.3} parent=139 // pred_check_branch
          %1284 = sbr.rel (%p1282) target = $region144
        $region143: #{generator_block_apply.3} parent=139 // pred_region
          %s1285 = sand.u32 %s373, 1
          %s1286 = scalar_lea.sflag [#allocation4], %s1285
          %s1287 = sand.u32 %s373, 1
          %s1288 = smul.addr %s1287, 4
          %s1289 = scalar_lea.vmem [#allocation25], %s1288
          %1290 = dma.done %s1286, 64
        $region144: #{generator_block_apply.3} parent=139 // pred_fallthru
          _
      $region140: #{generator_block_apply.3} parent=5 // pred_fallthru
        _
    $region6: #{generator_block_apply.3} parent=1 // loop_footer
      %s39 = sadd.s32 1, %s35
    $region7: #{generator_block_apply.3} parent=1 // loop_footer_branch
      %34 = sbr.rel target = $region3
    $region8: #{generator_block_apply.3} parent=1 // loop_exit
      _
    %1291 = vsyncpa [#allocation3], 1
    %s1292 = scalar_lea.sflag [#allocation3], 1
    %1293 = vsyncpa %s1292, 1
    %1294 = vsyncpa [#allocation6], 1
    %s1295 = scalar_lea.sflag [#allocation6], 1
    %1296 = vsyncpa %s1295, 1
    %1297 = vsyncpa [#allocation9], 1
    %1298 = vsyncpa [#allocation12], 1
    %1299 = vsyncpa [#allocation15], 1
    %1300 = vsyncpa [#allocation18], 1
    %1301 = vsyncpa [#allocation21], 1
    %1302 = vsyncpa [#allocation24], 1
    %1303 = vsyncpa [#allocation4], 1
    %s1304 = scalar_lea.sflag [#allocation4], 1
    %1305 = vsyncpa %s1304, 1

</llo_original>
